<compile_context>
chip_gen: v7x
topology: tpu7x:2x2x1
jax: 0.10.0
libtpu: 0.0.40
codegen_flags: <defaults>
</compile_context>

<pallas_src>
import functools

import jax
import jax.numpy as jnp
from jax.experimental import pallas as pl
from jax.experimental.pallas import tpu as pltpu


# ---------------------------------------------------------------------------
# Fused Pallas kernel: whole generator = chain of matmuls + activations
# ---------------------------------------------------------------------------
def _generator_fused_kernel(x_ref, *refs, acts):
    """x_ref : (TM, Din) flattened latent tile (VMEM)
       refs  : (W_0, ..., W_{L-1}, out_ref); W_l is the dense bf16
               (h*w*Cin, ho*wo*Cout) linear map of layer l (VMEM, resident)
       out_ref: (TM, Dout_last) lane-dense NCHW-flat output tile (VMEM)"""
    w_refs = refs[:-1]
    o_ref = refs[-1]
    h = x_ref[...].astype(jnp.float32)
    for w_ref, act in zip(w_refs, acts):
        # bf16 MXU operands, f32 accumulation; epilogue stays f32 (v5e-safe).
        h = jnp.dot(h.astype(w_ref.dtype), w_ref[...],
                    preferred_element_type=jnp.float32)
        if act == "relu":
            h = jnp.maximum(h, 0.0)
        elif act == "tanh":
            h = jnp.tanh(h)
    o_ref[...] = h.astype(o_ref.dtype)


@functools.partial(jax.jit, static_argnames=("acts", "out_chw"))
def _generator_forward_jit(x_nchw, weights, acts, out_chw):
    n = x_nchw.shape[0]
    # (N, z, 1, 1) NCHW -> (N, z): flattening is the identity (no transpose op).
    x_flat = x_nchw.reshape(n, -1)
    din = x_flat.shape[1]
    dout = weights[-1].shape[1]

    # Pad batch/sublane dim to a multiple of 8 (full-vreg stores); tile rows at
    # 128 for large batches so the VMEM-resident weights are reused each step.
    n_pad8 = -(-n // 8) * 8
    tm = n_pad8 if n_pad8 <= 128 else 128
    n_padded = -(-n_pad8 // tm) * tm
    if n_padded != n:
        x_flat = jnp.pad(x_flat, ((0, n_padded - n), (0, 0)))
    grid = (n_padded // tm,)

    kernel = functools.partial(_generator_fused_kernel, acts=acts)
    # Weights: full-array blocks with constant index_map -> stay VMEM-resident
    # across grid steps (DMA'd once per call).
    w_specs = [pl.BlockSpec(w.shape, lambda i: (0, 0)) for w in weights]
    out_flat = pl.pallas_call(
        kernel,
        out_shape=jax.ShapeDtypeStruct((n_padded, dout), jnp.float32),
        grid=grid,
        in_specs=[pl.BlockSpec((tm, din), lambda i: (i, 0))] + w_specs,
        out_specs=pl.BlockSpec((tm, dout), lambda i: (i, 0)),
        compiler_params=pltpu.CompilerParams(
            dimension_semantics=("parallel",)),
    )(x_flat, *weights)

    c, ho, wo = out_chw
    # Columns were permuted to NCHW-flat order at build time: only a reshape.
    return out_flat[:n].reshape(n, c, ho, wo)


def generator_forward(x_nchw, fused):
    # NOTE: nn.parallel.data_parallel multi-GPU dispatch has no single-device
    # equivalent; forward semantics are identical on one device.
    return _generator_forward_jit(x_nchw, fused["weights"], fused["acts"],
                                  fused["out_chw"])


# ---------------------------------------------------------------------------
# Parameter construction (mirrors the PyTorch __init__ logic)
# ---------------------------------------------------------------------------
def build_generator_params(key, num_channels, z_dim, conv_dim, image_size,
                           num_extra_layers, use_BN):
    assert image_size % 16 == 0, "image size must be a multiple of 16!"
    # TODO(synk): BatchNorm2d (training-mode batch statistics) not implemented;
    # this configuration uses use_BN=False, so no BN layers are created.
    assert not use_BN

    def nxt():
        nonlocal key
        key, sub = jax.random.split(key)
        return sub

    layers = []
    conv_depth = conv_dim // 2
    conv_size = 4
    while conv_size != image_size:
        conv_depth *= 2
        conv_size *= 2
    # init: ConvTranspose2d(z_dim, conv_depth, 4, 1, 0) + ReLU
    layers.append(("convt",
                   0.05 * jax.random.normal(nxt(), (z_dim, conv_depth, 4, 4),
                                            jnp.float32),
                   1, 0, "relu"))
    conv_size = 4
    while conv_size < image_size // 2:
        layers.append(("convt",
                       0.05 * jax.random.normal(nxt(),
                                                (conv_depth, conv_depth // 2, 4, 4),
                                                jnp.float32),
                       2, 1, "relu"))
        conv_depth //= 2
        conv_size *= 2
    for _ in range(num_extra_layers):
        layers.append(("conv",
                       0.05 * jax.random.normal(nxt(),
                                                (conv_depth, conv_depth, 3, 3),
                                                jnp.float32),
                       1, "relu"))
    layers.append(("convt",
                   0.05 * jax.random.normal(nxt(), (conv_depth, num_channels, 4, 4),
                                            jnp.float32),
                   2, 1, "tanh"))
    return layers


def _layer_linear_apply(x_nhwc, layer):
    """Apply one bias-free conv / transposed-conv layer (NO activation)."""
    if layer[0] == "convt":
        _, w_t, s, p, _ = layer
        kh = w_t.shape[2]
        w_c = jnp.transpose(w_t[:, :, ::-1, ::-1], (2, 3, 0, 1))   # -> HWIO
        return jax.lax.conv_general_dilated(
            x_nhwc, w_c, window_strides=(1, 1),
            padding=[(kh - 1 - p, kh - 1 - p)] * 2,
            lhs_dilation=(s, s),
            dimension_numbers=("NHWC", "HWIO", "NHWC"))
    _, w, p, _ = layer
    w_c = jnp.transpose(w, (2, 3, 1, 0))                            # -> HWIO
    return jax.lax.conv_general_dilated(
        x_nhwc, w_c, window_strides=(1, 1), padding=[(p, p)] * 2,
        dimension_numbers=("NHWC", "HWIO", "NHWC"))


def build_fused_generator(layers, z_dim, weight_dtype=jnp.bfloat16):
    """One-time weight re-parameterization (build time, not per forward):
    each linear layer becomes a dense (h*w*Cin, ho*wo*Cout) matrix over the
    NHWC-flattened activation (identity basis pushed through the exact conv),
    cast to bf16.  The last matrix's columns are permuted into NCHW-flat
    order so the kernel output needs no post-transpose."""
    h, w, c = 1, 1, z_dim
    weights, acts = [], []
    total_bytes = 0
    for li, layer in enumerate(layers):
        din = h * w * c
        basis = jnp.eye(din, dtype=jnp.float32).reshape(din, h, w, c)
        y = _layer_linear_apply(basis, layer)          # (din, ho, wo, co)
        _, ho, wo, co = y.shape
        if li == len(layers) - 1:
            # Fold NHWC->NCHW output permutation into the final weight matrix.
            wmat = jnp.transpose(y, (0, 3, 1, 2)).reshape(din, co * ho * wo)
        else:
            wmat = y.reshape(din, ho * wo * co)
        wmat = wmat.astype(weight_dtype)
        total_bytes += wmat.size * wmat.dtype.itemsize
        weights.append(wmat)
        acts.append(layer[-1])
        h, w, c = ho, wo, co
    # Guard: the dense Toeplitz footprint scales as (H*W*C)^2; for larger
    # image_size/conv_dim it would blow past VMEM (v7x's 64 MiB first).
    # TODO(synk): for bigger configs, switch to in-kernel im2col convs from
    # the original small weights instead of dense Toeplitz matrices.
    assert total_bytes < 24 * 1024 * 1024, (
        f"densified weights ({total_bytes / 2**20:.1f} MiB) too large for "
        "VMEM-resident fusion; this config needs the im2col path")
    return {"weights": tuple(weights), "acts": tuple(acts),
            "out_chw": (c, h, w)}


# ---------------------------------------------------------------------------
# Pure-JAX reference (per-layer f32 lax convolutions) for correctness check
# ---------------------------------------------------------------------------
def _ref_layer(x, layer):
    y = _layer_linear_apply(x, layer)
    act = layer[-1]
    if act == "relu":
        return jnp.maximum(y, 0.0)
    if act == "tanh":
        return jnp.tanh(y)
    return y


if __name__ == "__main__":
    key = jax.random.PRNGKey(0)
    pkey, xkey = jax.random.split(key)

    num_channels, z_dim, conv_dim, image_size = 3, 8, 8, 16
    num_extra_layers, use_BN = 1, False
    batch = 2

    layers = build_generator_params(pkey, num_channels, z_dim, conv_dim,
                                    image_size, num_extra_layers, use_BN)
    fused = build_fused_generator(layers, z_dim)

    # Generator input is latent noise of shape (N, z_dim, 1, 1), NCHW.
    z = jax.random.normal(xkey, (batch, z_dim, 1, 1), jnp.float32)

    out = generator_forward(z, fused)
    out = jax.block_until_ready(out)
    assert out.shape == (batch, num_channels, image_size, image_size), out.shape

    # Cross-check against a pure-JAX f32 reference (tolerance relaxed for the
    # bf16 weight quantization; accumulation in the kernel remains f32).
    xr = jnp.transpose(z, (0, 2, 3, 1))
    for layer in layers:
        xr = _ref_layer(xr, layer)
    ref = jnp.transpose(xr, (0, 3, 1, 2))
    max_err = float(jnp.max(jnp.abs(out - ref)))
    assert jnp.allclose(out, ref, rtol=5e-2, atol=5e-2), max_err

    print("KERNEL_OK")
</pallas_src>

<mosaic_0001>
module attributes {stable_mosaic.version = 11 : i64} {
  func.func @_generator_fused_kernel(%arg0: i32, %arg1: memref<8x8xf32, #tpu.memory_space<vmem>>, %arg2: memref<8x256xbf16, #tpu.memory_space<vmem>>, %arg3: memref<256x512xbf16, #tpu.memory_space<vmem>>, %arg4: memref<512x512xbf16, #tpu.memory_space<vmem>>, %arg5: memref<512x768xbf16, #tpu.memory_space<vmem>>, %arg6: memref<8x768xf32, #tpu.memory_space<vmem>>) attributes {dimension_semantics = [#tpu.dimension_semantics<parallel>], iteration_bounds = array<i64: 1>, scalar_prefetch = 0 : i64, scratch_operands = 0 : i64, tpu.core_type = #tpu.core_type<tc>, window_params = [{transform_indices = @transform_0, window_bounds = array<i64: 8, 8>}, {pipeline_mode = #tpu.pipeline_mode<synchronous>, transform_indices = @transform_1, window_bounds = array<i64: 8, 256>}, {pipeline_mode = #tpu.pipeline_mode<synchronous>, transform_indices = @transform_2, window_bounds = array<i64: 256, 512>}, {pipeline_mode = #tpu.pipeline_mode<synchronous>, transform_indices = @transform_3, window_bounds = array<i64: 512, 512>}, {pipeline_mode = #tpu.pipeline_mode<synchronous>, transform_indices = @transform_4, window_bounds = array<i64: 512, 768>}, {transform_indices = @transform_5, window_bounds = array<i64: 8, 768>}]} {
    %c0 = arith.constant 0 : index
    %c0_0 = arith.constant 0 : index
    %0 = vector.load %arg1[%c0, %c0_0] : memref<8x8xf32, #tpu.memory_space<vmem>>, vector<8x8xf32>
    %1 = arith.truncf %0 : vector<8x8xf32> to vector<8x8xbf16>
    %c0_1 = arith.constant 0 : index
    %c0_2 = arith.constant 0 : index
    %2 = vector.load %arg2[%c0_1, %c0_2] : memref<8x256xbf16, #tpu.memory_space<vmem>>, vector<8x256xbf16>
    %cst = arith.constant dense<0.000000e+00> : vector<8x256xf32>
    %3 = tpu.matmul %1, %2, %cst {dimension_numbers = #tpu.dot_dimension_numbers<[1], [0], [0], [1], [0, 0, 1, 1], [], []>} : vector<8x8xbf16>, vector<8x256xbf16>, vector<8x256xf32> -> vector<8x256xf32>
    %cst_3 = arith.constant 0.000000e+00 : f32
    %4 = vector.broadcast %cst_3 : f32 to vector<8x256xf32>
    %5 = arith.maximumf %3, %4 : vector<8x256xf32>
    %6 = arith.truncf %5 : vector<8x256xf32> to vector<8x256xbf16>
    %c0_4 = arith.constant 0 : index
    %c0_5 = arith.constant 0 : index
    %7 = vector.load %arg3[%c0_4, %c0_5] : memref<256x512xbf16, #tpu.memory_space<vmem>>, vector<256x512xbf16>
    %cst_6 = arith.constant dense<0.000000e+00> : vector<8x512xf32>
    %8 = tpu.matmul %6, %7, %cst_6 {dimension_numbers = #tpu.dot_dimension_numbers<[1], [0], [0], [1], [0, 0, 1, 1], [], []>} : vector<8x256xbf16>, vector<256x512xbf16>, vector<8x512xf32> -> vector<8x512xf32>
    %cst_7 = arith.constant 0.000000e+00 : f32
    %9 = vector.broadcast %cst_7 : f32 to vector<8x512xf32>
    %10 = arith.maximumf %8, %9 : vector<8x512xf32>
    %11 = arith.truncf %10 : vector<8x512xf32> to vector<8x512xbf16>
    %c0_8 = arith.constant 0 : index
    %c0_9 = arith.constant 0 : index
    %12 = vector.load %arg4[%c0_8, %c0_9] : memref<512x512xbf16, #tpu.memory_space<vmem>>, vector<512x512xbf16>
    %cst_10 = arith.constant dense<0.000000e+00> : vector<8x512xf32>
    %13 = tpu.matmul %11, %12, %cst_10 {dimension_numbers = #tpu.dot_dimension_numbers<[1], [0], [0], [1], [0, 0, 1, 1], [], []>} : vector<8x512xbf16>, vector<512x512xbf16>, vector<8x512xf32> -> vector<8x512xf32>
    %cst_11 = arith.constant 0.000000e+00 : f32
    %14 = vector.broadcast %cst_11 : f32 to vector<8x512xf32>
    %15 = arith.maximumf %13, %14 : vector<8x512xf32>
    %16 = arith.truncf %15 : vector<8x512xf32> to vector<8x512xbf16>
    %c0_12 = arith.constant 0 : index
    %c0_13 = arith.constant 0 : index
    %17 = vector.load %arg5[%c0_12, %c0_13] : memref<512x768xbf16, #tpu.memory_space<vmem>>, vector<512x768xbf16>
    %cst_14 = arith.constant dense<0.000000e+00> : vector<8x768xf32>
    %18 = tpu.matmul %16, %17, %cst_14 {dimension_numbers = #tpu.dot_dimension_numbers<[1], [0], [0], [1], [0, 0, 1, 1], [], []>} : vector<8x512xbf16>, vector<512x768xbf16>, vector<8x768xf32> -> vector<8x768xf32>
    %19 = math.tanh %18 : vector<8x768xf32>
    %c0_15 = arith.constant 0 : index
    %c0_16 = arith.constant 0 : index
    %20 = vector.load %arg6[%c0_15, %c0_16] : memref<8x768xf32, #tpu.memory_space<vmem>>, vector<8x768xf32>
    tpu.vector_store %arg6[%c0_15, %c0_16], %19 {strides = array<i32>} : memref<8x768xf32, #tpu.memory_space<vmem>>, vector<8x768xf32>,
    return
  }
  func.func @transform_0(%arg0: i32) -> (i32, i32) {
    %c0_i32 = arith.constant 0 : i32
    %c0_i32_0 = arith.constant 0 : i32
    return %arg0, %c0_i32 : i32, i32
  }
  func.func @transform_1(%arg0: i32) -> (i32, i32) {
    %c0_i32 = arith.constant 0 : i32
    %c0_i32_0 = arith.constant 0 : i32
    %c0_i32_1 = arith.constant 0 : i32
    return %c0_i32, %c0_i32_0 : i32, i32
  }
  func.func @transform_2(%arg0: i32) -> (i32, i32) {
    %c0_i32 = arith.constant 0 : i32
    %c0_i32_0 = arith.constant 0 : i32
    %c0_i32_1 = arith.constant 0 : i32
    return %c0_i32, %c0_i32_0 : i32, i32
  }
  func.func @transform_3(%arg0: i32) -> (i32, i32) {
    %c0_i32 = arith.constant 0 : i32
    %c0_i32_0 = arith.constant 0 : i32
    %c0_i32_1 = arith.constant 0 : i32
    return %c0_i32, %c0_i32_0 : i32, i32
  }
  func.func @transform_4(%arg0: i32) -> (i32, i32) {
    %c0_i32 = arith.constant 0 : i32
    %c0_i32_0 = arith.constant 0 : i32
    %c0_i32_1 = arith.constant 0 : i32
    return %c0_i32, %c0_i32_0 : i32, i32
  }
  func.func @transform_5(%arg0: i32) -> (i32, i32) {
    %c0_i32 = arith.constant 0 : i32
    %c0_i32_0 = arith.constant 0 : i32
    return %arg0, %c0_i32 : i32, i32
  }
}

</mosaic_0001>

<llo_original>
// kernel: _generator_forward_jit.1
$region0: #{_generator_forward_jit.1}
  #allocation0 [shape = 'u32[]', space=smem, size = 0x4, offset = 0x4, fixed_abs, tag = 'smem constant byte address 0x4 - core index']
  #allocation1 [shape = 'u32[144,128]{1,0:T(1,128)}', space=vmem, size = 0x12000, scoped, tag = 'internal scratch']
  %s0 = inlined_call_operand.vmem [shape: f32[8,8], index: 0, kind: input, shape index: {}]
  %s1 = inlined_call_operand.vmem [shape: bf16[8,256], index: 1, kind: input, shape index: {}]
  %s2 = inlined_call_operand.hbm [shape: bf16[256,512], index: 2, kind: input, shape index: {}]
  %s3 = inlined_call_operand.hbm [shape: bf16[512,512], index: 3, kind: input, shape index: {}]
  %s4 = inlined_call_operand.hbm [shape: bf16[512,768], index: 4, kind: input, shape index: {}]
  %s5 = inlined_call_operand.vmem [shape: f32[8,768], index: 5, kind: output, shape index: {}]
  %s6 = sld [smem:[#allocation0]]
  $region42: #{_generator_forward_jit.1} parent=0
    _
  %s8 = ssub.s32 1, %s6
  %s9 = scalar_select 0, %s8, %s6
  $region1: #{_generator_forward_jit.1} parent=0
    #allocation2 [shape = 'u8[262144]{0}', space=vmem, size = 0x40000, scoped, tag = 'input window, operand 2, single buffered']
    #allocation3 [shape = 's32[1]{0}', space=sflag, size = 0x4, scoped, tag = 'scoped memory for _generator_forward_jit.1']
    #allocation4 [shape = 'u8[524288]{0}', space=vmem, size = 0x80000, scoped, tag = 'input window, operand 3, single buffered']
    #allocation5 [shape = 's32[1]{0}', space=sflag, size = 0x4, scoped, tag = 'scoped memory for _generator_forward_jit.1']
    #allocation6 [shape = 'u8[786432]{0}', space=vmem, size = 0xc0000, scoped, tag = 'input window, operand 4, single buffered']
    %10 = vsyncpa [#allocation3], 0
    %11 = vsyncpa [#allocation5], 0
    // Predicated region
    $region2: #{_generator_forward_jit.1} parent=1 // pred_check
      _
    $region3: #{_generator_forward_jit.1} parent=1 // pred_check_branch
      %13 = sbr.rel (0) target = $region5
    $region4: #{_generator_forward_jit.1} parent=1 // pred_region
      _
    $region5: #{_generator_forward_jit.1} parent=1 // pred_fallthru
      _
    // Predicated region
    $region6: #{_generator_forward_jit.1} parent=1 // pred_check
      _
    $region7: #{_generator_forward_jit.1} parent=1 // pred_check_branch
      %15 = sbr.rel (0) target = $region9
    $region8: #{_generator_forward_jit.1} parent=1 // pred_region
      _
    $region9: #{_generator_forward_jit.1} parent=1 // pred_fallthru
      _
    // Predicated region
    $region10: #{_generator_forward_jit.1} parent=1 // pred_check
      _
    $region11: #{_generator_forward_jit.1} parent=1 // pred_check_branch
      %17 = sbr.rel (0) target = $region13
    $region12: #{_generator_forward_jit.1} parent=1 // pred_region
      %s19 = ssub.s32 8192, 8192
      %20 = vsyncadd [#allocation3], %s19
      %s21 = sshll.u32 [#allocation2], 4
      %s22 = int_to_ptr.vmem [resolvable:$true] %s21
      %27 = dma.hbm_to_vmem [thread:$0]  %s2, 8192, %s22, [#allocation3], 256, 256, 16
    $region13: #{_generator_forward_jit.1} parent=1 // pred_fallthru
      _
    // Predicated region
    $region14: #{_generator_forward_jit.1} parent=1 // pred_check
      _
    $region15: #{_generator_forward_jit.1} parent=1 // pred_check_branch
      %29 = sbr.rel (0) target = $region17
    $region16: #{_generator_forward_jit.1} parent=1 // pred_region
      %s31 = ssub.s32 16384, 16384
      %32 = vsyncadd [#allocation5], %s31
      %s33 = sshll.u32 [#allocation4], 4
      %s34 = int_to_ptr.vmem [resolvable:$true] %s33
      %39 = dma.hbm_to_vmem [thread:$0]  %s3, 16384, %s34, [#allocation5], 256, 256, 16
    $region17: #{_generator_forward_jit.1} parent=1 // pred_fallthru
      _
    // Predicated region
    $region18: #{_generator_forward_jit.1} parent=1 // pred_check
      _
    $region19: #{_generator_forward_jit.1} parent=1 // pred_check_branch
      %41 = sbr.rel (0) target = $region21
    $region20: #{_generator_forward_jit.1} parent=1 // pred_region
      %s43 = ssub.s32 24576, 24576
      %44 = vsyncadd [#allocation5], %s43
      %s45 = sshll.u32 [#allocation6], 4
      %s46 = int_to_ptr.vmem [resolvable:$true] %s45
      %51 = dma.hbm_to_vmem [thread:$0]  %s4, 24576, %s46, [#allocation5], 384, 384, 24
    $region21: #{_generator_forward_jit.1} parent=1 // pred_fallthru
      _
    // Predicated region
    $region22: #{_generator_forward_jit.1} parent=1 // pred_check
      _
    $region23: #{_generator_forward_jit.1} parent=1 // pred_check_branch
      %53 = sbr.rel (0) target = $region25
    $region24: #{_generator_forward_jit.1} parent=1 // pred_region
      %54 = dma.done [#allocation3], 8192
    $region25: #{_generator_forward_jit.1} parent=1 // pred_fallthru
      _
    // Predicated region
    $region26: #{_generator_forward_jit.1} parent=1 // pred_check
      _
    $region27: #{_generator_forward_jit.1} parent=1 // pred_check_branch
      %56 = sbr.rel (0) target = $region29
    $region28: #{_generator_forward_jit.1} parent=1 // pred_region
      %57 = dma.done [#allocation5], 16384
    $region29: #{_generator_forward_jit.1} parent=1 // pred_fallthru
      _
    // Predicated region
    $region30: #{_generator_forward_jit.1} parent=1 // pred_check
      _
    $region31: #{_generator_forward_jit.1} parent=1 // pred_check_branch
      %59 = sbr.rel (0) target = $region33
    $region32: #{_generator_forward_jit.1} parent=1 // pred_region
      %60 = dma.done [#allocation5], 24576
    $region33: #{_generator_forward_jit.1} parent=1 // pred_fallthru
      _
    %v62 = vld [vmem:[%s0] sm:$0xff]
    %v63 = vpack.c.bf16 %v62, %v62
    %v64 = vld [vmem:[%s1] sm:$0xff]
    %v66 = vunpack.c.l.b16 %v64
    %v67 = vunpack.c.h.b16 %v64
    %v68 = vpack.c.b16 %v66, %v66
    %v69 = vpack.c.b16 %v67, %v67
    %vm70 = vcmask 64512
    %v72 = vsel %vm70, %v63, 0
    %vm74 = vcmask 1043456
    %v76 = vsel %vm74, %v68, 0
    %v79 = vsel %vm74, %v69, 0
    %81 = vmatprep.subr.bf16.mxu0 %v79
    %82 = vmatpush1.bf16.msra.mxu0 %v76
    %83 = vmatprep.subr.bf16.mxu0 0
    %84 = vmatpush1.bf16.msra.mxu0 0
    %85 = vmatprep.subr.bf16.mxu0 0
    %86 = vmatpush1.bf16.msra.mxu0 0
    %87 = vmatprep.subr.bf16.mxu0 0
    %88 = vmatpush1.bf16.msra.mxu0 0
    %89 = vmatprep.subr.bf16.mxu0 0
    %90 = vmatpush1.bf16.msra.mxu0 0
    %91 = vmatprep.subr.bf16.mxu0 0
    %92 = vmatpush1.bf16.msra.mxu0 0
    %93 = vmatprep.subr.bf16.mxu0 0
    %94 = vmatpush1.bf16.msra.mxu0 0
    %95 = vmatprep.subr.bf16.mxu0 0
    %96 = vmatpush1.bf16.msra.mxu0 0
    %97 = vmatprep.subr.bf16.mxu0 0
    %98 = vmatpush1.bf16.msra.mxu0 0
    %99 = vmatprep.subr.bf16.mxu0 0
    %100 = vmatpush1.bf16.msra.mxu0 0
    %101 = vmatprep.subr.bf16.mxu0 0
    %102 = vmatpush1.bf16.msra.mxu0 0
    %103 = vmatprep.subr.bf16.mxu0 0
    %104 = vmatpush1.bf16.msra.mxu0 0
    %105 = vmatprep.subr.bf16.mxu0 0
    %106 = vmatpush1.bf16.msra.mxu0 0
    %107 = vmatprep.subr.bf16.mxu0 0
    %108 = vmatpush1.bf16.msra.mxu0 0
    %109 = vmatprep.subr.bf16.mxu0 0
    %110 = vmatpush1.bf16.msra.mxu0 0
    %111 = vmatprep.subr.bf16.mxu0 0
    %112 = vmatpush1.bf16.msra.mxu0 0
    %113 = vmatprep.mubr.bf16.mxu0 0
    %114 = vmatmul.mubr.bf16.gmra.mrb[0].mxu0 %v72
    %v115 = vpop.f32.mrb[0].mxu0
    %v116 = vadd.f32 0.0, %v115
    %v117 = vpop.f32.mrb[0].mxu0
    %v118 = vadd.f32 0.0, %v117
    %v119 = vpop.f32.mrb[0].mxu0
    %v120 = vpop.f32.mrb[0].mxu0
    %121 = vdwg.mxu0
    %v122 = vmax.f32 %v116, 0.0
    %v123 = vmax.f32 %v118, 0.0
    %v124 = vpack.c.bf16 %v122, %v122
    %v125 = vpack.c.bf16 %v123, %v123
    %v126 = vld [vmem:[#allocation2] sm:$0xff]
    %v127 = vld [vmem:[#allocation2 + $0x8] sm:$0xff]
    %v128 = vld [vmem:[#allocation2 + $0x10] sm:$0xff]
    %v129 = vld [vmem:[#allocation2 + $0x18] sm:$0xff]
    %v130 = vld [vmem:[#allocation2 + $0x20] sm:$0xff]
    %v131 = vld [vmem:[#allocation2 + $0x28] sm:$0xff]
    %v132 = vld [vmem:[#allocation2 + $0x30] sm:$0xff]
    %v133 = vld [vmem:[#allocation2 + $0x38] sm:$0xff]
    %v134 = vld [vmem:[#allocation2 + $0x40] sm:$0xff]
    %v135 = vld [vmem:[#allocation2 + $0x48] sm:$0xff]
    %v136 = vld [vmem:[#allocation2 + $0x50] sm:$0xff]
    %v137 = vld [vmem:[#allocation2 + $0x58] sm:$0xff]
    %v138 = vld [vmem:[#allocation2 + $0x60] sm:$0xff]
    %v139 = vld [vmem:[#allocation2 + $0x68] sm:$0xff]
    %v140 = vld [vmem:[#allocation2 + $0x70] sm:$0xff]
    %v141 = vld [vmem:[#allocation2 + $0x78] sm:$0xff]
    %v142 = vld [vmem:[#allocation2 + $0x80] sm:$0xff]
    %v143 = vld [vmem:[#allocation2 + $0x88] sm:$0xff]
    %v144 = vld [vmem:[#allocation2 + $0x90] sm:$0xff]
    %v145 = vld [vmem:[#allocation2 + $0x98] sm:$0xff]
    %v146 = vld [vmem:[#allocation2 + $0xa0] sm:$0xff]
    %v147 = vld [vmem:[#allocation2 + $0xa8] sm:$0xff]
    %v148 = vld [vmem:[#allocation2 + $0xb0] sm:$0xff]
    %v149 = vld [vmem:[#allocation2 + $0xb8] sm:$0xff]
    %v150 = vld [vmem:[#allocation2 + $0xc0] sm:$0xff]
    %v151 = vld [vmem:[#allocation2 + $0xc8] sm:$0xff]
    %v152 = vld [vmem:[#allocation2 + $0xd0] sm:$0xff]
    %v153 = vld [vmem:[#allocation2 + $0xd8] sm:$0xff]
    %v154 = vld [vmem:[#allocation2 + $0xe0] sm:$0xff]
    %v155 = vld [vmem:[#allocation2 + $0xe8] sm:$0xff]
    %v156 = vld [vmem:[#allocation2 + $0xf0] sm:$0xff]
    %v157 = vld [vmem:[#allocation2 + $0xf8] sm:$0xff]
    %v158 = vld [vmem:[#allocation2 + $0x100] sm:$0xff]
    %v159 = vld [vmem:[#allocation2 + $0x108] sm:$0xff]
    %v160 = vld [vmem:[#allocation2 + $0x110] sm:$0xff]
    %v161 = vld [vmem:[#allocation2 + $0x118] sm:$0xff]
    %v162 = vld [vmem:[#allocation2 + $0x120] sm:$0xff]
    %v163 = vld [vmem:[#allocation2 + $0x128] sm:$0xff]
    %v164 = vld [vmem:[#allocation2 + $0x130] sm:$0xff]
    %v165 = vld [vmem:[#allocation2 + $0x138] sm:$0xff]
    %v166 = vld [vmem:[#allocation2 + $0x140] sm:$0xff]
    %v167 = vld [vmem:[#allocation2 + $0x148] sm:$0xff]
    %v168 = vld [vmem:[#allocation2 + $0x150] sm:$0xff]
    %v169 = vld [vmem:[#allocation2 + $0x158] sm:$0xff]
    %v170 = vld [vmem:[#allocation2 + $0x160] sm:$0xff]
    %v171 = vld [vmem:[#allocation2 + $0x168] sm:$0xff]
    %v172 = vld [vmem:[#allocation2 + $0x170] sm:$0xff]
    %v173 = vld [vmem:[#allocation2 + $0x178] sm:$0xff]
    %v174 = vld [vmem:[#allocation2 + $0x180] sm:$0xff]
    %v175 = vld [vmem:[#allocation2 + $0x188] sm:$0xff]
    %v176 = vld [vmem:[#allocation2 + $0x190] sm:$0xff]
    %v177 = vld [vmem:[#allocation2 + $0x198] sm:$0xff]
    %v178 = vld [vmem:[#allocation2 + $0x1a0] sm:$0xff]
    %v179 = vld [vmem:[#allocation2 + $0x1a8] sm:$0xff]
    %v180 = vld [vmem:[#allocation2 + $0x1b0] sm:$0xff]
    %v181 = vld [vmem:[#allocation2 + $0x1b8] sm:$0xff]
    %v182 = vld [vmem:[#allocation2 + $0x1c0] sm:$0xff]
    %v183 = vld [vmem:[#allocation2 + $0x1c8] sm:$0xff]
    %v184 = vld [vmem:[#allocation2 + $0x1d0] sm:$0xff]
    %v185 = vld [vmem:[#allocation2 + $0x1d8] sm:$0xff]
    %v186 = vld [vmem:[#allocation2 + $0x1e0] sm:$0xff]
    %v187 = vld [vmem:[#allocation2 + $0x1e8] sm:$0xff]
    %v188 = vld [vmem:[#allocation2 + $0x1f0] sm:$0xff]
    %v189 = vld [vmem:[#allocation2 + $0x1f8] sm:$0xff]
    %v254 = vunpack.c.l.b16 %v126
    %v255 = vunpack.c.h.b16 %v126
    %v256 = vunpack.c.l.b16 %v127
    %v257 = vunpack.c.h.b16 %v127
    %v258 = vunpack.c.l.b16 %v128
    %v259 = vunpack.c.h.b16 %v128
    %v260 = vunpack.c.l.b16 %v129
    %v261 = vunpack.c.h.b16 %v129
    %v262 = vunpack.c.l.b16 %v130
    %v263 = vunpack.c.h.b16 %v130
    %v264 = vunpack.c.l.b16 %v131
    %v265 = vunpack.c.h.b16 %v131
    %v266 = vunpack.c.l.b16 %v132
    %v267 = vunpack.c.h.b16 %v132
    %v268 = vunpack.c.l.b16 %v133
    %v269 = vunpack.c.h.b16 %v133
    %v270 = vunpack.c.l.b16 %v134
    %v271 = vunpack.c.h.b16 %v134
    %v272 = vunpack.c.l.b16 %v135
    %v273 = vunpack.c.h.b16 %v135
    %v274 = vunpack.c.l.b16 %v136
    %v275 = vunpack.c.h.b16 %v136
    %v276 = vunpack.c.l.b16 %v137
    %v277 = vunpack.c.h.b16 %v137
    %v278 = vunpack.c.l.b16 %v138
    %v279 = vunpack.c.h.b16 %v138
    %v280 = vunpack.c.l.b16 %v139
    %v281 = vunpack.c.h.b16 %v139
    %v282 = vunpack.c.l.b16 %v140
    %v283 = vunpack.c.h.b16 %v140
    %v284 = vunpack.c.l.b16 %v141
    %v285 = vunpack.c.h.b16 %v141
    %v286 = vunpack.c.l.b16 %v142
    %v287 = vunpack.c.h.b16 %v142
    %v288 = vunpack.c.l.b16 %v143
    %v289 = vunpack.c.h.b16 %v143
    %v290 = vunpack.c.l.b16 %v144
    %v291 = vunpack.c.h.b16 %v144
    %v292 = vunpack.c.l.b16 %v145
    %v293 = vunpack.c.h.b16 %v145
    %v294 = vunpack.c.l.b16 %v146
    %v295 = vunpack.c.h.b16 %v146
    %v296 = vunpack.c.l.b16 %v147
    %v297 = vunpack.c.h.b16 %v147
    %v298 = vunpack.c.l.b16 %v148
    %v299 = vunpack.c.h.b16 %v148
    %v300 = vunpack.c.l.b16 %v149
    %v301 = vunpack.c.h.b16 %v149
    %v302 = vunpack.c.l.b16 %v150
    %v303 = vunpack.c.h.b16 %v150
    %v304 = vunpack.c.l.b16 %v151
    %v305 = vunpack.c.h.b16 %v151
    %v306 = vunpack.c.l.b16 %v152
    %v307 = vunpack.c.h.b16 %v152
    %v308 = vunpack.c.l.b16 %v153
    %v309 = vunpack.c.h.b16 %v153
    %v310 = vunpack.c.l.b16 %v154
    %v311 = vunpack.c.h.b16 %v154
    %v312 = vunpack.c.l.b16 %v155
    %v313 = vunpack.c.h.b16 %v155
    %v314 = vunpack.c.l.b16 %v156
    %v315 = vunpack.c.h.b16 %v156
    %v316 = vunpack.c.l.b16 %v157
    %v317 = vunpack.c.h.b16 %v157
    %v318 = vunpack.c.l.b16 %v158
    %v319 = vunpack.c.h.b16 %v158
    %v320 = vunpack.c.l.b16 %v159
    %v321 = vunpack.c.h.b16 %v159
    %v322 = vunpack.c.l.b16 %v160
    %v323 = vunpack.c.h.b16 %v160
    %v324 = vunpack.c.l.b16 %v161
    %v325 = vunpack.c.h.b16 %v161
    %v326 = vunpack.c.l.b16 %v162
    %v327 = vunpack.c.h.b16 %v162
    %v328 = vunpack.c.l.b16 %v163
    %v329 = vunpack.c.h.b16 %v163
    %v330 = vunpack.c.l.b16 %v164
    %v331 = vunpack.c.h.b16 %v164
    %v332 = vunpack.c.l.b16 %v165
    %v333 = vunpack.c.h.b16 %v165
    %v334 = vunpack.c.l.b16 %v166
    %v335 = vunpack.c.h.b16 %v166
    %v336 = vunpack.c.l.b16 %v167
    %v337 = vunpack.c.h.b16 %v167
    %v338 = vunpack.c.l.b16 %v168
    %v339 = vunpack.c.h.b16 %v168
    %v340 = vunpack.c.l.b16 %v169
    %v341 = vunpack.c.h.b16 %v169
    %v342 = vunpack.c.l.b16 %v170
    %v343 = vunpack.c.h.b16 %v170
    %v344 = vunpack.c.l.b16 %v171
    %v345 = vunpack.c.h.b16 %v171
    %v346 = vunpack.c.l.b16 %v172
    %v347 = vunpack.c.h.b16 %v172
    %v348 = vunpack.c.l.b16 %v173
    %v349 = vunpack.c.h.b16 %v173
    %v350 = vunpack.c.l.b16 %v174
    %v351 = vunpack.c.h.b16 %v174
    %v352 = vunpack.c.l.b16 %v175
    %v353 = vunpack.c.h.b16 %v175
    %v354 = vunpack.c.l.b16 %v176
    %v355 = vunpack.c.h.b16 %v176
    %v356 = vunpack.c.l.b16 %v177
    %v357 = vunpack.c.h.b16 %v177
    %v358 = vunpack.c.l.b16 %v178
    %v359 = vunpack.c.h.b16 %v178
    %v360 = vunpack.c.l.b16 %v179
    %v361 = vunpack.c.h.b16 %v179
    %v362 = vunpack.c.l.b16 %v180
    %v363 = vunpack.c.h.b16 %v180
    %v364 = vunpack.c.l.b16 %v181
    %v365 = vunpack.c.h.b16 %v181
    %v366 = vunpack.c.l.b16 %v182
    %v367 = vunpack.c.h.b16 %v182
    %v368 = vunpack.c.l.b16 %v183
    %v369 = vunpack.c.h.b16 %v183
    %v370 = vunpack.c.l.b16 %v184
    %v371 = vunpack.c.h.b16 %v184
    %v372 = vunpack.c.l.b16 %v185
    %v373 = vunpack.c.h.b16 %v185
    %v374 = vunpack.c.l.b16 %v186
    %v375 = vunpack.c.h.b16 %v186
    %v376 = vunpack.c.l.b16 %v187
    %v377 = vunpack.c.h.b16 %v187
    %v378 = vunpack.c.l.b16 %v188
    %v379 = vunpack.c.h.b16 %v188
    %v380 = vunpack.c.l.b16 %v189
    %v381 = vunpack.c.h.b16 %v189
    %v382 = vpack.c.b16 %v258, %v254
    %v383 = vpack.c.b16 %v259, %v255
    %v384 = vpack.c.b16 %v260, %v256
    %v385 = vpack.c.b16 %v261, %v257
    %v386 = vpack.c.b16 %v266, %v262
    %v387 = vpack.c.b16 %v267, %v263
    %v388 = vpack.c.b16 %v268, %v264
    %v389 = vpack.c.b16 %v269, %v265
    %v390 = vpack.c.b16 %v274, %v270
    %v391 = vpack.c.b16 %v275, %v271
    %v392 = vpack.c.b16 %v276, %v272
    %v393 = vpack.c.b16 %v277, %v273
    %v394 = vpack.c.b16 %v282, %v278
    %v395 = vpack.c.b16 %v283, %v279
    %v396 = vpack.c.b16 %v284, %v280
    %v397 = vpack.c.b16 %v285, %v281
    %v398 = vpack.c.b16 %v290, %v286
    %v399 = vpack.c.b16 %v291, %v287
    %v400 = vpack.c.b16 %v292, %v288
    %v401 = vpack.c.b16 %v293, %v289
    %v402 = vpack.c.b16 %v298, %v294
    %v403 = vpack.c.b16 %v299, %v295
    %v404 = vpack.c.b16 %v300, %v296
    %v405 = vpack.c.b16 %v301, %v297
    %v406 = vpack.c.b16 %v306, %v302
    %v407 = vpack.c.b16 %v307, %v303
    %v408 = vpack.c.b16 %v308, %v304
    %v409 = vpack.c.b16 %v309, %v305
    %v410 = vpack.c.b16 %v314, %v310
    %v411 = vpack.c.b16 %v315, %v311
    %v412 = vpack.c.b16 %v316, %v312
    %v413 = vpack.c.b16 %v317, %v313
    %v414 = vpack.c.b16 %v322, %v318
    %v415 = vpack.c.b16 %v323, %v319
    %v416 = vpack.c.b16 %v324, %v320
    %v417 = vpack.c.b16 %v325, %v321
    %v418 = vpack.c.b16 %v330, %v326
    %v419 = vpack.c.b16 %v331, %v327
    %v420 = vpack.c.b16 %v332, %v328
    %v421 = vpack.c.b16 %v333, %v329
    %v422 = vpack.c.b16 %v338, %v334
    %v423 = vpack.c.b16 %v339, %v335
    %v424 = vpack.c.b16 %v340, %v336
    %v425 = vpack.c.b16 %v341, %v337
    %v426 = vpack.c.b16 %v346, %v342
    %v427 = vpack.c.b16 %v347, %v343
    %v428 = vpack.c.b16 %v348, %v344
    %v429 = vpack.c.b16 %v349, %v345
    %v430 = vpack.c.b16 %v354, %v350
    %v431 = vpack.c.b16 %v355, %v351
    %v432 = vpack.c.b16 %v356, %v352
    %v433 = vpack.c.b16 %v357, %v353
    %v434 = vpack.c.b16 %v362, %v358
    %v435 = vpack.c.b16 %v363, %v359
    %v436 = vpack.c.b16 %v364, %v360
    %v437 = vpack.c.b16 %v365, %v361
    %v438 = vpack.c.b16 %v370, %v366
    %v439 = vpack.c.b16 %v371, %v367
    %v440 = vpack.c.b16 %v372, %v368
    %v441 = vpack.c.b16 %v373, %v369
    %v442 = vpack.c.b16 %v378, %v374
    %v443 = vpack.c.b16 %v379, %v375
    %v444 = vpack.c.b16 %v380, %v376
    %v445 = vpack.c.b16 %v381, %v377
    %510 = vmatprep.subr.bf16.mxu0 %v383
    %511 = vmatpush1.bf16.msra.mxu0 %v382
    %512 = vmatprep.subr.bf16.mxu0 %v387
    %513 = vmatpush1.bf16.msra.mxu0 %v386
    %514 = vmatprep.subr.bf16.mxu0 %v391
    %515 = vmatpush1.bf16.msra.mxu0 %v390
    %516 = vmatprep.subr.bf16.mxu0 %v395
    %517 = vmatpush1.bf16.msra.mxu0 %v394
    %518 = vmatprep.subr.bf16.mxu0 %v399
    %519 = vmatpush1.bf16.msra.mxu0 %v398
    %520 = vmatprep.subr.bf16.mxu0 %v403
    %521 = vmatpush1.bf16.msra.mxu0 %v402
    %522 = vmatprep.subr.bf16.mxu0 %v407
    %523 = vmatpush1.bf16.msra.mxu0 %v406
    %524 = vmatprep.subr.bf16.mxu0 %v411
    %525 = vmatpush1.bf16.msra.mxu0 %v410
    %526 = vmatprep.subr.bf16.mxu0 %v415
    %527 = vmatpush1.bf16.msra.mxu0 %v414
    %528 = vmatprep.subr.bf16.mxu0 %v419
    %529 = vmatpush1.bf16.msra.mxu0 %v418
    %530 = vmatprep.subr.bf16.mxu0 %v423
    %531 = vmatpush1.bf16.msra.mxu0 %v422
    %532 = vmatprep.subr.bf16.mxu0 %v427
    %533 = vmatpush1.bf16.msra.mxu0 %v426
    %534 = vmatprep.subr.bf16.mxu0 %v431
    %535 = vmatpush1.bf16.msra.mxu0 %v430
    %536 = vmatprep.subr.bf16.mxu0 %v435
    %537 = vmatpush1.bf16.msra.mxu0 %v434
    %538 = vmatprep.subr.bf16.mxu0 %v439
    %539 = vmatpush1.bf16.msra.mxu0 %v438
    %540 = vmatprep.subr.bf16.mxu0 %v443
    %541 = vmatpush1.bf16.msra.mxu0 %v442
    %542 = vmatprep.mubr.bf16.mxu0 %v125
    %543 = vmatmul.mubr.bf16.gmra.mrb[0].mxu0 %v124
    %v544 = vpop.f32.mrb[0].mxu0
    %v545 = vadd.f32 0.0, %v544
    %v546 = vpop.f32.mrb[0].mxu0
    %v547 = vadd.f32 0.0, %v546
    %v548 = vpop.f32.mrb[0].mxu0
    %v549 = vpop.f32.mrb[0].mxu0
    %550 = vdwg.mxu0
    %551 = vmatprep.subr.bf16.mxu0 %v385
    %552 = vmatpush1.bf16.msra.mxu0 %v384
    %553 = vmatprep.subr.bf16.mxu0 %v389
    %554 = vmatpush1.bf16.msra.mxu0 %v388
    %555 = vmatprep.subr.bf16.mxu0 %v393
    %556 = vmatpush1.bf16.msra.mxu0 %v392
    %557 = vmatprep.subr.bf16.mxu0 %v397
    %558 = vmatpush1.bf16.msra.mxu0 %v396
    %559 = vmatprep.subr.bf16.mxu0 %v401
    %560 = vmatpush1.bf16.msra.mxu0 %v400
    %561 = vmatprep.subr.bf16.mxu0 %v405
    %562 = vmatpush1.bf16.msra.mxu0 %v404
    %563 = vmatprep.subr.bf16.mxu0 %v409
    %564 = vmatpush1.bf16.msra.mxu0 %v408
    %565 = vmatprep.subr.bf16.mxu0 %v413
    %566 = vmatpush1.bf16.msra.mxu0 %v412
    %567 = vmatprep.subr.bf16.mxu0 %v417
    %568 = vmatpush1.bf16.msra.mxu0 %v416
    %569 = vmatprep.subr.bf16.mxu0 %v421
    %570 = vmatpush1.bf16.msra.mxu0 %v420
    %571 = vmatprep.subr.bf16.mxu0 %v425
    %572 = vmatpush1.bf16.msra.mxu0 %v424
    %573 = vmatprep.subr.bf16.mxu0 %v429
    %574 = vmatpush1.bf16.msra.mxu0 %v428
    %575 = vmatprep.subr.bf16.mxu0 %v433
    %576 = vmatpush1.bf16.msra.mxu0 %v432
    %577 = vmatprep.subr.bf16.mxu0 %v437
    %578 = vmatpush1.bf16.msra.mxu0 %v436
    %579 = vmatprep.subr.bf16.mxu0 %v441
    %580 = vmatpush1.bf16.msra.mxu0 %v440
    %581 = vmatprep.subr.bf16.mxu0 %v445
    %582 = vmatpush1.bf16.msra.mxu0 %v444
    %583 = vmatprep.mubr.bf16.mxu0 %v125
    %584 = vmatmul.mubr.bf16.gmra.mrb[0].mxu0 %v124
    %v585 = vpop.f32.mrb[0].mxu0
    %v586 = vadd.f32 0.0, %v585
    %v587 = vpop.f32.mrb[0].mxu0
    %v588 = vadd.f32 0.0, %v587
    %v589 = vpop.f32.mrb[0].mxu0
    %v590 = vpop.f32.mrb[0].mxu0
    %591 = vdwg.mxu0
    %v592 = vmax.f32 %v545, 0.0
    %v593 = vmax.f32 %v547, 0.0
    %v594 = vmax.f32 %v586, 0.0
    %v595 = vmax.f32 %v588, 0.0
    %v596 = vpack.c.bf16 %v592, %v592
    %v597 = vpack.c.bf16 %v593, %v593
    %v598 = vpack.c.bf16 %v594, %v594
    %v599 = vpack.c.bf16 %v595, %v595
    %v600 = vld [vmem:[#allocation4] sm:$0xff]
    %v601 = vld [vmem:[#allocation4 + $0x8] sm:$0xff]
    %v602 = vld [vmem:[#allocation4 + $0x10] sm:$0xff]
    %v603 = vld [vmem:[#allocation4 + $0x18] sm:$0xff]
    %v604 = vld [vmem:[#allocation4 + $0x20] sm:$0xff]
    %v605 = vld [vmem:[#allocation4 + $0x28] sm:$0xff]
    %v606 = vld [vmem:[#allocation4 + $0x30] sm:$0xff]
    %v607 = vld [vmem:[#allocation4 + $0x38] sm:$0xff]
    %v608 = vld [vmem:[#allocation4 + $0x40] sm:$0xff]
    %v609 = vld [vmem:[#allocation4 + $0x48] sm:$0xff]
    %v610 = vld [vmem:[#allocation4 + $0x50] sm:$0xff]
    %v611 = vld [vmem:[#allocation4 + $0x58] sm:$0xff]
    %v612 = vld [vmem:[#allocation4 + $0x60] sm:$0xff]
    %v613 = vld [vmem:[#allocation4 + $0x68] sm:$0xff]
    %v614 = vld [vmem:[#allocation4 + $0x70] sm:$0xff]
    %v615 = vld [vmem:[#allocation4 + $0x78] sm:$0xff]
    %v616 = vld [vmem:[#allocation4 + $0x80] sm:$0xff]
    %v617 = vld [vmem:[#allocation4 + $0x88] sm:$0xff]
    %v618 = vld [vmem:[#allocation4 + $0x90] sm:$0xff]
    %v619 = vld [vmem:[#allocation4 + $0x98] sm:$0xff]
    %v620 = vld [vmem:[#allocation4 + $0xa0] sm:$0xff]
    %v621 = vld [vmem:[#allocation4 + $0xa8] sm:$0xff]
    %v622 = vld [vmem:[#allocation4 + $0xb0] sm:$0xff]
    %v623 = vld [vmem:[#allocation4 + $0xb8] sm:$0xff]
    %v624 = vld [vmem:[#allocation4 + $0xc0] sm:$0xff]
    %v625 = vld [vmem:[#allocation4 + $0xc8] sm:$0xff]
    %v626 = vld [vmem:[#allocation4 + $0xd0] sm:$0xff]
    %v627 = vld [vmem:[#allocation4 + $0xd8] sm:$0xff]
    %v628 = vld [vmem:[#allocation4 + $0xe0] sm:$0xff]
    %v629 = vld [vmem:[#allocation4 + $0xe8] sm:$0xff]
    %v630 = vld [vmem:[#allocation4 + $0xf0] sm:$0xff]
    %v631 = vld [vmem:[#allocation4 + $0xf8] sm:$0xff]
    %v632 = vld [vmem:[#allocation4 + $0x100] sm:$0xff]
    %v633 = vld [vmem:[#allocation4 + $0x108] sm:$0xff]
    %v634 = vld [vmem:[#allocation4 + $0x110] sm:$0xff]
    %v635 = vld [vmem:[#allocation4 + $0x118] sm:$0xff]
    %v636 = vld [vmem:[#allocation4 + $0x120] sm:$0xff]
    %v637 = vld [vmem:[#allocation4 + $0x128] sm:$0xff]
    %v638 = vld [vmem:[#allocation4 + $0x130] sm:$0xff]
    %v639 = vld [vmem:[#allocation4 + $0x138] sm:$0xff]
    %v640 = vld [vmem:[#allocation4 + $0x140] sm:$0xff]
    %v641 = vld [vmem:[#allocation4 + $0x148] sm:$0xff]
    %v642 = vld [vmem:[#allocation4 + $0x150] sm:$0xff]
    %v643 = vld [vmem:[#allocation4 + $0x158] sm:$0xff]
    %v644 = vld [vmem:[#allocation4 + $0x160] sm:$0xff]
    %v645 = vld [vmem:[#allocation4 + $0x168] sm:$0xff]
    %v646 = vld [vmem:[#allocation4 + $0x170] sm:$0xff]
    %v647 = vld [vmem:[#allocation4 + $0x178] sm:$0xff]
    %v648 = vld [vmem:[#allocation4 + $0x180] sm:$0xff]
    %v649 = vld [vmem:[#allocation4 + $0x188] sm:$0xff]
    %v650 = vld [vmem:[#allocation4 + $0x190] sm:$0xff]
    %v651 = vld [vmem:[#allocation4 + $0x198] sm:$0xff]
    %v652 = vld [vmem:[#allocation4 + $0x1a0] sm:$0xff]
    %v653 = vld [vmem:[#allocation4 + $0x1a8] sm:$0xff]
    %v654 = vld [vmem:[#allocation4 + $0x1b0] sm:$0xff]
    %v655 = vld [vmem:[#allocation4 + $0x1b8] sm:$0xff]
    %v656 = vld [vmem:[#allocation4 + $0x1c0] sm:$0xff]
    %v657 = vld [vmem:[#allocation4 + $0x1c8] sm:$0xff]
    %v658 = vld [vmem:[#allocation4 + $0x1d0] sm:$0xff]
    %v659 = vld [vmem:[#allocation4 + $0x1d8] sm:$0xff]
    %v660 = vld [vmem:[#allocation4 + $0x1e0] sm:$0xff]
    %v661 = vld [vmem:[#allocation4 + $0x1e8] sm:$0xff]
    %v662 = vld [vmem:[#allocation4 + $0x1f0] sm:$0xff]
    %v663 = vld [vmem:[#allocation4 + $0x1f8] sm:$0xff]
    %v664 = vld [vmem:[#allocation4 + $0x200] sm:$0xff]
    %v665 = vld [vmem:[#allocation4 + $0x208] sm:$0xff]
    %v666 = vld [vmem:[#allocation4 + $0x210] sm:$0xff]
    %v667 = vld [vmem:[#allocation4 + $0x218] sm:$0xff]
    %v668 = vld [vmem:[#allocation4 + $0x220] sm:$0xff]
    %v669 = vld [vmem:[#allocation4 + $0x228] sm:$0xff]
    %v670 = vld [vmem:[#allocation4 + $0x230] sm:$0xff]
    %v671 = vld [vmem:[#allocation4 + $0x238] sm:$0xff]
    %v672 = vld [vmem:[#allocation4 + $0x240] sm:$0xff]
    %v673 = vld [vmem:[#allocation4 + $0x248] sm:$0xff]
    %v674 = vld [vmem:[#allocation4 + $0x250] sm:$0xff]
    %v675 = vld [vmem:[#allocation4 + $0x258] sm:$0xff]
    %v676 = vld [vmem:[#allocation4 + $0x260] sm:$0xff]
    %v677 = vld [vmem:[#allocation4 + $0x268] sm:$0xff]
    %v678 = vld [vmem:[#allocation4 + $0x270] sm:$0xff]
    %v679 = vld [vmem:[#allocation4 + $0x278] sm:$0xff]
    %v680 = vld [vmem:[#allocation4 + $0x280] sm:$0xff]
    %v681 = vld [vmem:[#allocation4 + $0x288] sm:$0xff]
    %v682 = vld [vmem:[#allocation4 + $0x290] sm:$0xff]
    %v683 = vld [vmem:[#allocation4 + $0x298] sm:$0xff]
    %v684 = vld [vmem:[#allocation4 + $0x2a0] sm:$0xff]
    %v685 = vld [vmem:[#allocation4 + $0x2a8] sm:$0xff]
    %v686 = vld [vmem:[#allocation4 + $0x2b0] sm:$0xff]
    %v687 = vld [vmem:[#allocation4 + $0x2b8] sm:$0xff]
    %v688 = vld [vmem:[#allocation4 + $0x2c0] sm:$0xff]
    %v689 = vld [vmem:[#allocation4 + $0x2c8] sm:$0xff]
    %v690 = vld [vmem:[#allocation4 + $0x2d0] sm:$0xff]
    %v691 = vld [vmem:[#allocation4 + $0x2d8] sm:$0xff]
    %v692 = vld [vmem:[#allocation4 + $0x2e0] sm:$0xff]
    %v693 = vld [vmem:[#allocation4 + $0x2e8] sm:$0xff]
    %v694 = vld [vmem:[#allocation4 + $0x2f0] sm:$0xff]
    %v695 = vld [vmem:[#allocation4 + $0x2f8] sm:$0xff]
    %v696 = vld [vmem:[#allocation4 + $0x300] sm:$0xff]
    %v697 = vld [vmem:[#allocation4 + $0x308] sm:$0xff]
    %v698 = vld [vmem:[#allocation4 + $0x310] sm:$0xff]
    %v699 = vld [vmem:[#allocation4 + $0x318] sm:$0xff]
    %v700 = vld [vmem:[#allocation4 + $0x320] sm:$0xff]
    %v701 = vld [vmem:[#allocation4 + $0x328] sm:$0xff]
    %v702 = vld [vmem:[#allocation4 + $0x330] sm:$0xff]
    %v703 = vld [vmem:[#allocation4 + $0x338] sm:$0xff]
    %v704 = vld [vmem:[#allocation4 + $0x340] sm:$0xff]
    %v705 = vld [vmem:[#allocation4 + $0x348] sm:$0xff]
    %v706 = vld [vmem:[#allocation4 + $0x350] sm:$0xff]
    %v707 = vld [vmem:[#allocation4 + $0x358] sm:$0xff]
    %v708 = vld [vmem:[#allocation4 + $0x360] sm:$0xff]
    %v709 = vld [vmem:[#allocation4 + $0x368] sm:$0xff]
    %v710 = vld [vmem:[#allocation4 + $0x370] sm:$0xff]
    %v711 = vld [vmem:[#allocation4 + $0x378] sm:$0xff]
    %v712 = vld [vmem:[#allocation4 + $0x380] sm:$0xff]
    %v713 = vld [vmem:[#allocation4 + $0x388] sm:$0xff]
    %v714 = vld [vmem:[#allocation4 + $0x390] sm:$0xff]
    %v715 = vld [vmem:[#allocation4 + $0x398] sm:$0xff]
    %v716 = vld [vmem:[#allocation4 + $0x3a0] sm:$0xff]
    %v717 = vld [vmem:[#allocation4 + $0x3a8] sm:$0xff]
    %v718 = vld [vmem:[#allocation4 + $0x3b0] sm:$0xff]
    %v719 = vld [vmem:[#allocation4 + $0x3b8] sm:$0xff]
    %v720 = vld [vmem:[#allocation4 + $0x3c0] sm:$0xff]
    %v721 = vld [vmem:[#allocation4 + $0x3c8] sm:$0xff]
    %v722 = vld [vmem:[#allocation4 + $0x3d0] sm:$0xff]
    %v723 = vld [vmem:[#allocation4 + $0x3d8] sm:$0xff]
    %v724 = vld [vmem:[#allocation4 + $0x3e0] sm:$0xff]
    %v725 = vld [vmem:[#allocation4 + $0x3e8] sm:$0xff]
    %v726 = vld [vmem:[#allocation4 + $0x3f0] sm:$0xff]
    %v727 = vld [vmem:[#allocation4 + $0x3f8] sm:$0xff]
    %v856 = vunpack.c.l.b16 %v600
    %v857 = vunpack.c.h.b16 %v600
    %v858 = vunpack.c.l.b16 %v601
    %v859 = vunpack.c.h.b16 %v601
    %v860 = vunpack.c.l.b16 %v602
    %v861 = vunpack.c.h.b16 %v602
    %v862 = vunpack.c.l.b16 %v603
    %v863 = vunpack.c.h.b16 %v603
    %v864 = vunpack.c.l.b16 %v604
    %v865 = vunpack.c.h.b16 %v604
    %v866 = vunpack.c.l.b16 %v605
    %v867 = vunpack.c.h.b16 %v605
    %v868 = vunpack.c.l.b16 %v606
    %v869 = vunpack.c.h.b16 %v606
    %v870 = vunpack.c.l.b16 %v607
    %v871 = vunpack.c.h.b16 %v607
    %v872 = vunpack.c.l.b16 %v608
    %v873 = vunpack.c.h.b16 %v608
    %v874 = vunpack.c.l.b16 %v609
    %v875 = vunpack.c.h.b16 %v609
    %v876 = vunpack.c.l.b16 %v610
    %v877 = vunpack.c.h.b16 %v610
    %v878 = vunpack.c.l.b16 %v611
    %v879 = vunpack.c.h.b16 %v611
    %v880 = vunpack.c.l.b16 %v612
    %v881 = vunpack.c.h.b16 %v612
    %v882 = vunpack.c.l.b16 %v613
    %v883 = vunpack.c.h.b16 %v613
    %v884 = vunpack.c.l.b16 %v614
    %v885 = vunpack.c.h.b16 %v614
    %v886 = vunpack.c.l.b16 %v615
    %v887 = vunpack.c.h.b16 %v615
    %v888 = vunpack.c.l.b16 %v616
    %v889 = vunpack.c.h.b16 %v616
    %v890 = vunpack.c.l.b16 %v617
    %v891 = vunpack.c.h.b16 %v617
    %v892 = vunpack.c.l.b16 %v618
    %v893 = vunpack.c.h.b16 %v618
    %v894 = vunpack.c.l.b16 %v619
    %v895 = vunpack.c.h.b16 %v619
    %v896 = vunpack.c.l.b16 %v620
    %v897 = vunpack.c.h.b16 %v620
    %v898 = vunpack.c.l.b16 %v621
    %v899 = vunpack.c.h.b16 %v621
    %v900 = vunpack.c.l.b16 %v622
    %v901 = vunpack.c.h.b16 %v622
    %v902 = vunpack.c.l.b16 %v623
    %v903 = vunpack.c.h.b16 %v623
    %v904 = vunpack.c.l.b16 %v624
    %v905 = vunpack.c.h.b16 %v624
    %v906 = vunpack.c.l.b16 %v625
    %v907 = vunpack.c.h.b16 %v625
    %v908 = vunpack.c.l.b16 %v626
    %v909 = vunpack.c.h.b16 %v626
    %v910 = vunpack.c.l.b16 %v627
    %v911 = vunpack.c.h.b16 %v627
    %v912 = vunpack.c.l.b16 %v628
    %v913 = vunpack.c.h.b16 %v628
    %v914 = vunpack.c.l.b16 %v629
    %v915 = vunpack.c.h.b16 %v629
    %v916 = vunpack.c.l.b16 %v630
    %v917 = vunpack.c.h.b16 %v630
    %v918 = vunpack.c.l.b16 %v631
    %v919 = vunpack.c.h.b16 %v631
    %v920 = vunpack.c.l.b16 %v632
    %v921 = vunpack.c.h.b16 %v632
    %v922 = vunpack.c.l.b16 %v633
    %v923 = vunpack.c.h.b16 %v633
    %v924 = vunpack.c.l.b16 %v634
    %v925 = vunpack.c.h.b16 %v634
    %v926 = vunpack.c.l.b16 %v635
    %v927 = vunpack.c.h.b16 %v635
    %v928 = vunpack.c.l.b16 %v636
    %v929 = vunpack.c.h.b16 %v636
    %v930 = vunpack.c.l.b16 %v637
    %v931 = vunpack.c.h.b16 %v637
    %v932 = vunpack.c.l.b16 %v638
    %v933 = vunpack.c.h.b16 %v638
    %v934 = vunpack.c.l.b16 %v639
    %v935 = vunpack.c.h.b16 %v639
    %v936 = vunpack.c.l.b16 %v640
    %v937 = vunpack.c.h.b16 %v640
    %v938 = vunpack.c.l.b16 %v641
    %v939 = vunpack.c.h.b16 %v641
    %v940 = vunpack.c.l.b16 %v642
    %v941 = vunpack.c.h.b16 %v642
    %v942 = vunpack.c.l.b16 %v643
    %v943 = vunpack.c.h.b16 %v643
    %v944 = vunpack.c.l.b16 %v644
    %v945 = vunpack.c.h.b16 %v644
    %v946 = vunpack.c.l.b16 %v645
    %v947 = vunpack.c.h.b16 %v645
    %v948 = vunpack.c.l.b16 %v646
    %v949 = vunpack.c.h.b16 %v646
    %v950 = vunpack.c.l.b16 %v647
    %v951 = vunpack.c.h.b16 %v647
    %v952 = vunpack.c.l.b16 %v648
    %v953 = vunpack.c.h.b16 %v648
    %v954 = vunpack.c.l.b16 %v649
    %v955 = vunpack.c.h.b16 %v649
    %v956 = vunpack.c.l.b16 %v650
    %v957 = vunpack.c.h.b16 %v650
    %v958 = vunpack.c.l.b16 %v651
    %v959 = vunpack.c.h.b16 %v651
    %v960 = vunpack.c.l.b16 %v652
    %v961 = vunpack.c.h.b16 %v652
    %v962 = vunpack.c.l.b16 %v653
    %v963 = vunpack.c.h.b16 %v653
    %v964 = vunpack.c.l.b16 %v654
    %v965 = vunpack.c.h.b16 %v654
    %v966 = vunpack.c.l.b16 %v655
    %v967 = vunpack.c.h.b16 %v655
    %v968 = vunpack.c.l.b16 %v656
    %v969 = vunpack.c.h.b16 %v656
    %v970 = vunpack.c.l.b16 %v657
    %v971 = vunpack.c.h.b16 %v657
    %v972 = vunpack.c.l.b16 %v658
    %v973 = vunpack.c.h.b16 %v658
    %v974 = vunpack.c.l.b16 %v659
    %v975 = vunpack.c.h.b16 %v659
    %v976 = vunpack.c.l.b16 %v660
    %v977 = vunpack.c.h.b16 %v660
    %v978 = vunpack.c.l.b16 %v661
    %v979 = vunpack.c.h.b16 %v661
    %v980 = vunpack.c.l.b16 %v662
    %v981 = vunpack.c.h.b16 %v662
    %v982 = vunpack.c.l.b16 %v663
    %v983 = vunpack.c.h.b16 %v663
    %v984 = vunpack.c.l.b16 %v664
    %v985 = vunpack.c.h.b16 %v664
    %v986 = vunpack.c.l.b16 %v665
    %v987 = vunpack.c.h.b16 %v665
    %v988 = vunpack.c.l.b16 %v666
    %v989 = vunpack.c.h.b16 %v666
    %v990 = vunpack.c.l.b16 %v667
    %v991 = vunpack.c.h.b16 %v667
    %v992 = vunpack.c.l.b16 %v668
    %v993 = vunpack.c.h.b16 %v668
    %v994 = vunpack.c.l.b16 %v669
    %v995 = vunpack.c.h.b16 %v669
    %v996 = vunpack.c.l.b16 %v670
    %v997 = vunpack.c.h.b16 %v670
    %v998 = vunpack.c.l.b16 %v671
    %v999 = vunpack.c.h.b16 %v671
    %v1000 = vunpack.c.l.b16 %v672
    %v1001 = vunpack.c.h.b16 %v672
    %v1002 = vunpack.c.l.b16 %v673
    %v1003 = vunpack.c.h.b16 %v673
    %v1004 = vunpack.c.l.b16 %v674
    %v1005 = vunpack.c.h.b16 %v674
    %v1006 = vunpack.c.l.b16 %v675
    %v1007 = vunpack.c.h.b16 %v675
    %v1008 = vunpack.c.l.b16 %v676
    %v1009 = vunpack.c.h.b16 %v676
    %v1010 = vunpack.c.l.b16 %v677
    %v1011 = vunpack.c.h.b16 %v677
    %v1012 = vunpack.c.l.b16 %v678
    %v1013 = vunpack.c.h.b16 %v678
    %v1014 = vunpack.c.l.b16 %v679
    %v1015 = vunpack.c.h.b16 %v679
    %v1016 = vunpack.c.l.b16 %v680
    %v1017 = vunpack.c.h.b16 %v680
    %v1018 = vunpack.c.l.b16 %v681
    %v1019 = vunpack.c.h.b16 %v681
    %v1020 = vunpack.c.l.b16 %v682
    %v1021 = vunpack.c.h.b16 %v682
    %v1022 = vunpack.c.l.b16 %v683
    %v1023 = vunpack.c.h.b16 %v683
    %v1024 = vunpack.c.l.b16 %v684
    %v1025 = vunpack.c.h.b16 %v684
    %v1026 = vunpack.c.l.b16 %v685
    %v1027 = vunpack.c.h.b16 %v685
    %v1028 = vunpack.c.l.b16 %v686
    %v1029 = vunpack.c.h.b16 %v686
    %v1030 = vunpack.c.l.b16 %v687
    %v1031 = vunpack.c.h.b16 %v687
    %v1032 = vunpack.c.l.b16 %v688
    %v1033 = vunpack.c.h.b16 %v688
    %v1034 = vunpack.c.l.b16 %v689
    %v1035 = vunpack.c.h.b16 %v689
    %v1036 = vunpack.c.l.b16 %v690
    %v1037 = vunpack.c.h.b16 %v690
    %v1038 = vunpack.c.l.b16 %v691
    %v1039 = vunpack.c.h.b16 %v691
    %v1040 = vunpack.c.l.b16 %v692
    %v1041 = vunpack.c.h.b16 %v692
    %v1042 = vunpack.c.l.b16 %v693
    %v1043 = vunpack.c.h.b16 %v693
    %v1044 = vunpack.c.l.b16 %v694
    %v1045 = vunpack.c.h.b16 %v694
    %v1046 = vunpack.c.l.b16 %v695
    %v1047 = vunpack.c.h.b16 %v695
    %v1048 = vunpack.c.l.b16 %v696
    %v1049 = vunpack.c.h.b16 %v696
    %v1050 = vunpack.c.l.b16 %v697
    %v1051 = vunpack.c.h.b16 %v697
    %v1052 = vunpack.c.l.b16 %v698
    %v1053 = vunpack.c.h.b16 %v698
    %v1054 = vunpack.c.l.b16 %v699
    %v1055 = vunpack.c.h.b16 %v699
    %v1056 = vunpack.c.l.b16 %v700
    %v1057 = vunpack.c.h.b16 %v700
    %v1058 = vunpack.c.l.b16 %v701
    %v1059 = vunpack.c.h.b16 %v701
    %v1060 = vunpack.c.l.b16 %v702
    %v1061 = vunpack.c.h.b16 %v702
    %v1062 = vunpack.c.l.b16 %v703
    %v1063 = vunpack.c.h.b16 %v703
    %v1064 = vunpack.c.l.b16 %v704
    %v1065 = vunpack.c.h.b16 %v704
    %v1066 = vunpack.c.l.b16 %v705
    %v1067 = vunpack.c.h.b16 %v705
    %v1068 = vunpack.c.l.b16 %v706
    %v1069 = vunpack.c.h.b16 %v706
    %v1070 = vunpack.c.l.b16 %v707
    %v1071 = vunpack.c.h.b16 %v707
    %v1072 = vunpack.c.l.b16 %v708
    %v1073 = vunpack.c.h.b16 %v708
    %v1074 = vunpack.c.l.b16 %v709
    %v1075 = vunpack.c.h.b16 %v709
    %v1076 = vunpack.c.l.b16 %v710
    %v1077 = vunpack.c.h.b16 %v710
    %v1078 = vunpack.c.l.b16 %v711
    %v1079 = vunpack.c.h.b16 %v711
    %v1080 = vunpack.c.l.b16 %v712
    %v1081 = vunpack.c.h.b16 %v712
    %v1082 = vunpack.c.l.b16 %v713
    %v1083 = vunpack.c.h.b16 %v713
    %v1084 = vunpack.c.l.b16 %v714
    %v1085 = vunpack.c.h.b16 %v714
    %v1086 = vunpack.c.l.b16 %v715
    %v1087 = vunpack.c.h.b16 %v715
    %v1088 = vunpack.c.l.b16 %v716
    %v1089 = vunpack.c.h.b16 %v716
    %v1090 = vunpack.c.l.b16 %v717
    %v1091 = vunpack.c.h.b16 %v717
    %v1092 = vunpack.c.l.b16 %v718
    %v1093 = vunpack.c.h.b16 %v718
    %v1094 = vunpack.c.l.b16 %v719
    %v1095 = vunpack.c.h.b16 %v719
    %v1096 = vunpack.c.l.b16 %v720
    %v1097 = vunpack.c.h.b16 %v720
    %v1098 = vunpack.c.l.b16 %v721
    %v1099 = vunpack.c.h.b16 %v721
    %v1100 = vunpack.c.l.b16 %v722
    %v1101 = vunpack.c.h.b16 %v722
    %v1102 = vunpack.c.l.b16 %v723
    %v1103 = vunpack.c.h.b16 %v723
    %v1104 = vunpack.c.l.b16 %v724
    %v1105 = vunpack.c.h.b16 %v724
    %v1106 = vunpack.c.l.b16 %v725
    %v1107 = vunpack.c.h.b16 %v725
    %v1108 = vunpack.c.l.b16 %v726
    %v1109 = vunpack.c.h.b16 %v726
    %v1110 = vunpack.c.l.b16 %v727
    %v1111 = vunpack.c.h.b16 %v727
    %v1112 = vpack.c.b16 %v860, %v856
    %v1113 = vpack.c.b16 %v861, %v857
    %v1114 = vpack.c.b16 %v862, %v858
    %v1115 = vpack.c.b16 %v863, %v859
    %v1116 = vpack.c.b16 %v868, %v864
    %v1117 = vpack.c.b16 %v869, %v865
    %v1118 = vpack.c.b16 %v870, %v866
    %v1119 = vpack.c.b16 %v871, %v867
    %v1120 = vpack.c.b16 %v876, %v872
    %v1121 = vpack.c.b16 %v877, %v873
    %v1122 = vpack.c.b16 %v878, %v874
    %v1123 = vpack.c.b16 %v879, %v875
    %v1124 = vpack.c.b16 %v884, %v880
    %v1125 = vpack.c.b16 %v885, %v881
    %v1126 = vpack.c.b16 %v886, %v882
    %v1127 = vpack.c.b16 %v887, %v883
    %v1128 = vpack.c.b16 %v892, %v888
    %v1129 = vpack.c.b16 %v893, %v889
    %v1130 = vpack.c.b16 %v894, %v890
    %v1131 = vpack.c.b16 %v895, %v891
    %v1132 = vpack.c.b16 %v900, %v896
    %v1133 = vpack.c.b16 %v901, %v897
    %v1134 = vpack.c.b16 %v902, %v898
    %v1135 = vpack.c.b16 %v903, %v899
    %v1136 = vpack.c.b16 %v908, %v904
    %v1137 = vpack.c.b16 %v909, %v905
    %v1138 = vpack.c.b16 %v910, %v906
    %v1139 = vpack.c.b16 %v911, %v907
    %v1140 = vpack.c.b16 %v916, %v912
    %v1141 = vpack.c.b16 %v917, %v913
    %v1142 = vpack.c.b16 %v918, %v914
    %v1143 = vpack.c.b16 %v919, %v915
    %v1144 = vpack.c.b16 %v924, %v920
    %v1145 = vpack.c.b16 %v925, %v921
    %v1146 = vpack.c.b16 %v926, %v922
    %v1147 = vpack.c.b16 %v927, %v923
    %v1148 = vpack.c.b16 %v932, %v928
    %v1149 = vpack.c.b16 %v933, %v929
    %v1150 = vpack.c.b16 %v934, %v930
    %v1151 = vpack.c.b16 %v935, %v931
    %v1152 = vpack.c.b16 %v940, %v936
    %v1153 = vpack.c.b16 %v941, %v937
    %v1154 = vpack.c.b16 %v942, %v938
    %v1155 = vpack.c.b16 %v943, %v939
    %v1156 = vpack.c.b16 %v948, %v944
    %v1157 = vpack.c.b16 %v949, %v945
    %v1158 = vpack.c.b16 %v950, %v946
    %v1159 = vpack.c.b16 %v951, %v947
    %v1160 = vpack.c.b16 %v956, %v952
    %v1161 = vpack.c.b16 %v957, %v953
    %v1162 = vpack.c.b16 %v958, %v954
    %v1163 = vpack.c.b16 %v959, %v955
    %v1164 = vpack.c.b16 %v964, %v960
    %v1165 = vpack.c.b16 %v965, %v961
    %v1166 = vpack.c.b16 %v966, %v962
    %v1167 = vpack.c.b16 %v967, %v963
    %v1168 = vpack.c.b16 %v972, %v968
    %v1169 = vpack.c.b16 %v973, %v969
    %v1170 = vpack.c.b16 %v974, %v970
    %v1171 = vpack.c.b16 %v975, %v971
    %v1172 = vpack.c.b16 %v980, %v976
    %v1173 = vpack.c.b16 %v981, %v977
    %v1174 = vpack.c.b16 %v982, %v978
    %v1175 = vpack.c.b16 %v983, %v979
    %v1176 = vpack.c.b16 %v988, %v984
    %v1177 = vpack.c.b16 %v989, %v985
    %v1178 = vpack.c.b16 %v990, %v986
    %v1179 = vpack.c.b16 %v991, %v987
    %v1180 = vpack.c.b16 %v996, %v992
    %v1181 = vpack.c.b16 %v997, %v993
    %v1182 = vpack.c.b16 %v998, %v994
    %v1183 = vpack.c.b16 %v999, %v995
    %v1184 = vpack.c.b16 %v1004, %v1000
    %v1185 = vpack.c.b16 %v1005, %v1001
    %v1186 = vpack.c.b16 %v1006, %v1002
    %v1187 = vpack.c.b16 %v1007, %v1003
    %v1188 = vpack.c.b16 %v1012, %v1008
    %v1189 = vpack.c.b16 %v1013, %v1009
    %v1190 = vpack.c.b16 %v1014, %v1010
    %v1191 = vpack.c.b16 %v1015, %v1011
    %v1192 = vpack.c.b16 %v1020, %v1016
    %v1193 = vpack.c.b16 %v1021, %v1017
    %v1194 = vpack.c.b16 %v1022, %v1018
    %v1195 = vpack.c.b16 %v1023, %v1019
    %v1196 = vpack.c.b16 %v1028, %v1024
    %v1197 = vpack.c.b16 %v1029, %v1025
    %v1198 = vpack.c.b16 %v1030, %v1026
    %v1199 = vpack.c.b16 %v1031, %v1027
    %v1200 = vpack.c.b16 %v1036, %v1032
    %v1201 = vpack.c.b16 %v1037, %v1033
    %v1202 = vpack.c.b16 %v1038, %v1034
    %v1203 = vpack.c.b16 %v1039, %v1035
    %v1204 = vpack.c.b16 %v1044, %v1040
    %v1205 = vpack.c.b16 %v1045, %v1041
    %v1206 = vpack.c.b16 %v1046, %v1042
    %v1207 = vpack.c.b16 %v1047, %v1043
    %v1208 = vpack.c.b16 %v1052, %v1048
    %v1209 = vpack.c.b16 %v1053, %v1049
    %v1210 = vpack.c.b16 %v1054, %v1050
    %v1211 = vpack.c.b16 %v1055, %v1051
    %v1212 = vpack.c.b16 %v1060, %v1056
    %v1213 = vpack.c.b16 %v1061, %v1057
    %v1214 = vpack.c.b16 %v1062, %v1058
    %v1215 = vpack.c.b16 %v1063, %v1059
    %v1216 = vpack.c.b16 %v1068, %v1064
    %v1217 = vpack.c.b16 %v1069, %v1065
    %v1218 = vpack.c.b16 %v1070, %v1066
    %v1219 = vpack.c.b16 %v1071, %v1067
    %v1220 = vpack.c.b16 %v1076, %v1072
    %v1221 = vpack.c.b16 %v1077, %v1073
    %v1222 = vpack.c.b16 %v1078, %v1074
    %v1223 = vpack.c.b16 %v1079, %v1075
    %v1224 = vpack.c.b16 %v1084, %v1080
    %v1225 = vpack.c.b16 %v1085, %v1081
    %v1226 = vpack.c.b16 %v1086, %v1082
    %v1227 = vpack.c.b16 %v1087, %v1083
    %v1228 = vpack.c.b16 %v1092, %v1088
    %v1229 = vpack.c.b16 %v1093, %v1089
    %v1230 = vpack.c.b16 %v1094, %v1090
    %v1231 = vpack.c.b16 %v1095, %v1091
    %v1232 = vpack.c.b16 %v1100, %v1096
    %v1233 = vpack.c.b16 %v1101, %v1097
    %v1234 = vpack.c.b16 %v1102, %v1098
    %v1235 = vpack.c.b16 %v1103, %v1099
    %v1236 = vpack.c.b16 %v1108, %v1104
    %v1237 = vpack.c.b16 %v1109, %v1105
    %v1238 = vpack.c.b16 %v1110, %v1106
    %v1239 = vpack.c.b16 %v1111, %v1107
    %1368 = vmatprep.subr.bf16.mxu0 %v1113
    %1369 = vmatpush1.bf16.msra.mxu0 %v1112
    %1370 = vmatprep.subr.bf16.mxu0 %v1117
    %1371 = vmatpush1.bf16.msra.mxu0 %v1116
    %1372 = vmatprep.subr.bf16.mxu0 %v1121
    %1373 = vmatpush1.bf16.msra.mxu0 %v1120
    %1374 = vmatprep.subr.bf16.mxu0 %v1125
    %1375 = vmatpush1.bf16.msra.mxu0 %v1124
    %1376 = vmatprep.subr.bf16.mxu0 %v1129
    %1377 = vmatpush1.bf16.msra.mxu0 %v1128
    %1378 = vmatprep.subr.bf16.mxu0 %v1133
    %1379 = vmatpush1.bf16.msra.mxu0 %v1132
    %1380 = vmatprep.subr.bf16.mxu0 %v1137
    %1381 = vmatpush1.bf16.msra.mxu0 %v1136
    %1382 = vmatprep.subr.bf16.mxu0 %v1141
    %1383 = vmatpush1.bf16.msra.mxu0 %v1140
    %1384 = vmatprep.subr.bf16.mxu0 %v1145
    %1385 = vmatpush1.bf16.msra.mxu0 %v1144
    %1386 = vmatprep.subr.bf16.mxu0 %v1149
    %1387 = vmatpush1.bf16.msra.mxu0 %v1148
    %1388 = vmatprep.subr.bf16.mxu0 %v1153
    %1389 = vmatpush1.bf16.msra.mxu0 %v1152
    %1390 = vmatprep.subr.bf16.mxu0 %v1157
    %1391 = vmatpush1.bf16.msra.mxu0 %v1156
    %1392 = vmatprep.subr.bf16.mxu0 %v1161
    %1393 = vmatpush1.bf16.msra.mxu0 %v1160
    %1394 = vmatprep.subr.bf16.mxu0 %v1165
    %1395 = vmatpush1.bf16.msra.mxu0 %v1164
    %1396 = vmatprep.subr.bf16.mxu0 %v1169
    %1397 = vmatpush1.bf16.msra.mxu0 %v1168
    %1398 = vmatprep.subr.bf16.mxu0 %v1173
    %1399 = vmatpush1.bf16.msra.mxu0 %v1172
    %1400 = vmatprep.mubr.bf16.mxu0 %v597
    %1401 = vmatmul.mubr.bf16.gmra.mrb[0].mxu0 %v596
    %v1402 = vpop.f32.mrb[0].mxu0
    %v1403 = vadd.f32 0.0, %v1402
    %v1404 = vpop.f32.mrb[0].mxu0
    %v1405 = vadd.f32 0.0, %v1404
    %v1406 = vpop.f32.mrb[0].mxu0
    %v1407 = vpop.f32.mrb[0].mxu0
    %1408 = vdwg.mxu0
    %1409 = vmatprep.subr.bf16.mxu0 %v1177
    %1410 = vmatpush1.bf16.msra.mxu0 %v1176
    %1411 = vmatprep.subr.bf16.mxu0 %v1181
    %1412 = vmatpush1.bf16.msra.mxu0 %v1180
    %1413 = vmatprep.subr.bf16.mxu0 %v1185
    %1414 = vmatpush1.bf16.msra.mxu0 %v1184
    %1415 = vmatprep.subr.bf16.mxu0 %v1189
    %1416 = vmatpush1.bf16.msra.mxu0 %v1188
    %1417 = vmatprep.subr.bf16.mxu0 %v1193
    %1418 = vmatpush1.bf16.msra.mxu0 %v1192
    %1419 = vmatprep.subr.bf16.mxu0 %v1197
    %1420 = vmatpush1.bf16.msra.mxu0 %v1196
    %1421 = vmatprep.subr.bf16.mxu0 %v1201
    %1422 = vmatpush1.bf16.msra.mxu0 %v1200
    %1423 = vmatprep.subr.bf16.mxu0 %v1205
    %1424 = vmatpush1.bf16.msra.mxu0 %v1204
    %1425 = vmatprep.subr.bf16.mxu0 %v1209
    %1426 = vmatpush1.bf16.msra.mxu0 %v1208
    %1427 = vmatprep.subr.bf16.mxu0 %v1213
    %1428 = vmatpush1.bf16.msra.mxu0 %v1212
    %1429 = vmatprep.subr.bf16.mxu0 %v1217
    %1430 = vmatpush1.bf16.msra.mxu0 %v1216
    %1431 = vmatprep.subr.bf16.mxu0 %v1221
    %1432 = vmatpush1.bf16.msra.mxu0 %v1220
    %1433 = vmatprep.subr.bf16.mxu0 %v1225
    %1434 = vmatpush1.bf16.msra.mxu0 %v1224
    %1435 = vmatprep.subr.bf16.mxu0 %v1229
    %1436 = vmatpush1.bf16.msra.mxu0 %v1228
    %1437 = vmatprep.subr.bf16.mxu0 %v1233
    %1438 = vmatpush1.bf16.msra.mxu0 %v1232
    %1439 = vmatprep.subr.bf16.mxu0 %v1237
    %1440 = vmatpush1.bf16.msra.mxu0 %v1236
    %1441 = vmatprep.mubr.bf16.mxu0 %v599
    %1442 = vmatmul.mubr.bf16.gmra.mrb[0].mxu0 %v598
    %v1443 = vpop.f32.mrb[0].mxu0
    %v1444 = vadd.f32 %v1403, %v1443
    %v1445 = vpop.f32.mrb[0].mxu0
    %v1446 = vadd.f32 %v1405, %v1445
    %v1447 = vpop.f32.mrb[0].mxu0
    %v1448 = vpop.f32.mrb[0].mxu0
    %1449 = vdwg.mxu0
    %1450 = vmatprep.subr.bf16.mxu0 %v1115
    %1451 = vmatpush1.bf16.msra.mxu0 %v1114
    %1452 = vmatprep.subr.bf16.mxu0 %v1119
    %1453 = vmatpush1.bf16.msra.mxu0 %v1118
    %1454 = vmatprep.subr.bf16.mxu0 %v1123
    %1455 = vmatpush1.bf16.msra.mxu0 %v1122
    %1456 = vmatprep.subr.bf16.mxu0 %v1127
    %1457 = vmatpush1.bf16.msra.mxu0 %v1126
    %1458 = vmatprep.subr.bf16.mxu0 %v1131
    %1459 = vmatpush1.bf16.msra.mxu0 %v1130
    %1460 = vmatprep.subr.bf16.mxu0 %v1135
    %1461 = vmatpush1.bf16.msra.mxu0 %v1134
    %1462 = vmatprep.subr.bf16.mxu0 %v1139
    %1463 = vmatpush1.bf16.msra.mxu0 %v1138
    %1464 = vmatprep.subr.bf16.mxu0 %v1143
    %1465 = vmatpush1.bf16.msra.mxu0 %v1142
    %1466 = vmatprep.subr.bf16.mxu0 %v1147
    %1467 = vmatpush1.bf16.msra.mxu0 %v1146
    %1468 = vmatprep.subr.bf16.mxu0 %v1151
    %1469 = vmatpush1.bf16.msra.mxu0 %v1150
    %1470 = vmatprep.subr.bf16.mxu0 %v1155
    %1471 = vmatpush1.bf16.msra.mxu0 %v1154
    %1472 = vmatprep.subr.bf16.mxu0 %v1159
    %1473 = vmatpush1.bf16.msra.mxu0 %v1158
    %1474 = vmatprep.subr.bf16.mxu0 %v1163
    %1475 = vmatpush1.bf16.msra.mxu0 %v1162
    %1476 = vmatprep.subr.bf16.mxu0 %v1167
    %1477 = vmatpush1.bf16.msra.mxu0 %v1166
    %1478 = vmatprep.subr.bf16.mxu0 %v1171
    %1479 = vmatpush1.bf16.msra.mxu0 %v1170
    %1480 = vmatprep.subr.bf16.mxu0 %v1175
    %1481 = vmatpush1.bf16.msra.mxu0 %v1174
    %1482 = vmatprep.mubr.bf16.mxu0 %v597
    %1483 = vmatmul.mubr.bf16.gmra.mrb[0].mxu0 %v596
    %v1484 = vpop.f32.mrb[0].mxu0
    %v1485 = vadd.f32 0.0, %v1484
    %v1486 = vpop.f32.mrb[0].mxu0
    %v1487 = vadd.f32 0.0, %v1486
    %v1488 = vpop.f32.mrb[0].mxu0
    %v1489 = vpop.f32.mrb[0].mxu0
    %1490 = vdwg.mxu0
    %1491 = vmatprep.subr.bf16.mxu0 %v1179
    %1492 = vmatpush1.bf16.msra.mxu0 %v1178
    %1493 = vmatprep.subr.bf16.mxu0 %v1183
    %1494 = vmatpush1.bf16.msra.mxu0 %v1182
    %1495 = vmatprep.subr.bf16.mxu0 %v1187
    %1496 = vmatpush1.bf16.msra.mxu0 %v1186
    %1497 = vmatprep.subr.bf16.mxu0 %v1191
    %1498 = vmatpush1.bf16.msra.mxu0 %v1190
    %1499 = vmatprep.subr.bf16.mxu0 %v1195
    %1500 = vmatpush1.bf16.msra.mxu0 %v1194
    %1501 = vmatprep.subr.bf16.mxu0 %v1199
    %1502 = vmatpush1.bf16.msra.mxu0 %v1198
    %1503 = vmatprep.subr.bf16.mxu0 %v1203
    %1504 = vmatpush1.bf16.msra.mxu0 %v1202
    %1505 = vmatprep.subr.bf16.mxu0 %v1207
    %1506 = vmatpush1.bf16.msra.mxu0 %v1206
    %1507 = vmatprep.subr.bf16.mxu0 %v1211
    %1508 = vmatpush1.bf16.msra.mxu0 %v1210
    %1509 = vmatprep.subr.bf16.mxu0 %v1215
    %1510 = vmatpush1.bf16.msra.mxu0 %v1214
    %1511 = vmatprep.subr.bf16.mxu0 %v1219
    %1512 = vmatpush1.bf16.msra.mxu0 %v1218
    %1513 = vmatprep.subr.bf16.mxu0 %v1223
    %1514 = vmatpush1.bf16.msra.mxu0 %v1222
    %1515 = vmatprep.subr.bf16.mxu0 %v1227
    %1516 = vmatpush1.bf16.msra.mxu0 %v1226
    %1517 = vmatprep.subr.bf16.mxu0 %v1231
    %1518 = vmatpush1.bf16.msra.mxu0 %v1230
    %1519 = vmatprep.subr.bf16.mxu0 %v1235
    %1520 = vmatpush1.bf16.msra.mxu0 %v1234
    %1521 = vmatprep.subr.bf16.mxu0 %v1239
    %1522 = vmatpush1.bf16.msra.mxu0 %v1238
    %1523 = vmatprep.mubr.bf16.mxu0 %v599
    %1524 = vmatmul.mubr.bf16.gmra.mrb[0].mxu0 %v598
    %v1525 = vpop.f32.mrb[0].mxu0
    %v1526 = vadd.f32 %v1485, %v1525
    %v1527 = vpop.f32.mrb[0].mxu0
    %v1528 = vadd.f32 %v1487, %v1527
    %v1529 = vpop.f32.mrb[0].mxu0
    %v1530 = vpop.f32.mrb[0].mxu0
    %1531 = vdwg.mxu0
    %v1532 = vmax.f32 %v1444, 0.0
    %v1533 = vmax.f32 %v1446, 0.0
    %v1534 = vmax.f32 %v1526, 0.0
    %v1535 = vmax.f32 %v1528, 0.0
    %v1536 = vpack.c.bf16 %v1532, %v1532
    %v1537 = vpack.c.bf16 %v1533, %v1533
    %v1538 = vpack.c.bf16 %v1534, %v1534
    %v1539 = vpack.c.bf16 %v1535, %v1535
    %v1540 = vld [vmem:[#allocation6] sm:$0xff]
    %v1541 = vld [vmem:[#allocation6 + $0x8] sm:$0xff]
    %v1542 = vld [vmem:[#allocation6 + $0x10] sm:$0xff]
    %v1543 = vld [vmem:[#allocation6 + $0x18] sm:$0xff]
    %v1544 = vld [vmem:[#allocation6 + $0x20] sm:$0xff]
    %v1545 = vld [vmem:[#allocation6 + $0x28] sm:$0xff]
    %v1546 = vld [vmem:[#allocation6 + $0x30] sm:$0xff]
    %v1547 = vld [vmem:[#allocation6 + $0x38] sm:$0xff]
    %v1548 = vld [vmem:[#allocation6 + $0x40] sm:$0xff]
    %v1549 = vld [vmem:[#allocation6 + $0x48] sm:$0xff]
    %v1550 = vld [vmem:[#allocation6 + $0x50] sm:$0xff]
    %v1551 = vld [vmem:[#allocation6 + $0x58] sm:$0xff]
    %v1552 = vld [vmem:[#allocation6 + $0x60] sm:$0xff]
    %v1553 = vld [vmem:[#allocation6 + $0x68] sm:$0xff]
    %v1554 = vld [vmem:[#allocation6 + $0x70] sm:$0xff]
    %v1555 = vld [vmem:[#allocation6 + $0x78] sm:$0xff]
    %v1556 = vld [vmem:[#allocation6 + $0x80] sm:$0xff]
    %v1557 = vld [vmem:[#allocation6 + $0x88] sm:$0xff]
    %v1558 = vld [vmem:[#allocation6 + $0x90] sm:$0xff]
    %v1559 = vld [vmem:[#allocation6 + $0x98] sm:$0xff]
    %v1560 = vld [vmem:[#allocation6 + $0xa0] sm:$0xff]
    %v1561 = vld [vmem:[#allocation6 + $0xa8] sm:$0xff]
    %v1562 = vld [vmem:[#allocation6 + $0xb0] sm:$0xff]
    %v1563 = vld [vmem:[#allocation6 + $0xb8] sm:$0xff]
    %v1564 = vld [vmem:[#allocation6 + $0xc0] sm:$0xff]
    %v1565 = vld [vmem:[#allocation6 + $0xc8] sm:$0xff]
    %v1566 = vld [vmem:[#allocation6 + $0xd0] sm:$0xff]
    %v1567 = vld [vmem:[#allocation6 + $0xd8] sm:$0xff]
    %v1568 = vld [vmem:[#allocation6 + $0xe0] sm:$0xff]
    %v1569 = vld [vmem:[#allocation6 + $0xe8] sm:$0xff]
    %v1570 = vld [vmem:[#allocation6 + $0xf0] sm:$0xff]
    %v1571 = vld [vmem:[#allocation6 + $0xf8] sm:$0xff]
    %v1572 = vld [vmem:[#allocation6 + $0x100] sm:$0xff]
    %v1573 = vld [vmem:[#allocation6 + $0x108] sm:$0xff]
    %v1574 = vld [vmem:[#allocation6 + $0x110] sm:$0xff]
    %v1575 = vld [vmem:[#allocation6 + $0x118] sm:$0xff]
    %v1576 = vld [vmem:[#allocation6 + $0x120] sm:$0xff]
    %v1577 = vld [vmem:[#allocation6 + $0x128] sm:$0xff]
    %v1578 = vld [vmem:[#allocation6 + $0x130] sm:$0xff]
    %v1579 = vld [vmem:[#allocation6 + $0x138] sm:$0xff]
    %v1580 = vld [vmem:[#allocation6 + $0x140] sm:$0xff]
    %v1581 = vld [vmem:[#allocation6 + $0x148] sm:$0xff]
    %v1582 = vld [vmem:[#allocation6 + $0x150] sm:$0xff]
    %v1583 = vld [vmem:[#allocation6 + $0x158] sm:$0xff]
    %v1584 = vld [vmem:[#allocation6 + $0x160] sm:$0xff]
    %v1585 = vld [vmem:[#allocation6 + $0x168] sm:$0xff]
    %v1586 = vld [vmem:[#allocation6 + $0x170] sm:$0xff]
    %v1587 = vld [vmem:[#allocation6 + $0x178] sm:$0xff]
    %v1588 = vld [vmem:[#allocation6 + $0x180] sm:$0xff]
    %v1589 = vld [vmem:[#allocation6 + $0x188] sm:$0xff]
    %v1590 = vld [vmem:[#allocation6 + $0x190] sm:$0xff]
    %v1591 = vld [vmem:[#allocation6 + $0x198] sm:$0xff]
    %v1592 = vld [vmem:[#allocation6 + $0x1a0] sm:$0xff]
    %v1593 = vld [vmem:[#allocation6 + $0x1a8] sm:$0xff]
    %v1594 = vld [vmem:[#allocation6 + $0x1b0] sm:$0xff]
    %v1595 = vld [vmem:[#allocation6 + $0x1b8] sm:$0xff]
    %v1596 = vld [vmem:[#allocation6 + $0x1c0] sm:$0xff]
    %v1597 = vld [vmem:[#allocation6 + $0x1c8] sm:$0xff]
    %v1598 = vld [vmem:[#allocation6 + $0x1d0] sm:$0xff]
    %v1599 = vld [vmem:[#allocation6 + $0x1d8] sm:$0xff]
    %v1600 = vld [vmem:[#allocation6 + $0x1e0] sm:$0xff]
    %v1601 = vld [vmem:[#allocation6 + $0x1e8] sm:$0xff]
    %v1602 = vld [vmem:[#allocation6 + $0x1f0] sm:$0xff]
    %v1603 = vld [vmem:[#allocation6 + $0x1f8] sm:$0xff]
    %v1604 = vld [vmem:[#allocation6 + $0x200] sm:$0xff]
    %v1605 = vld [vmem:[#allocation6 + $0x208] sm:$0xff]
    %v1606 = vld [vmem:[#allocation6 + $0x210] sm:$0xff]
    %v1607 = vld [vmem:[#allocation6 + $0x218] sm:$0xff]
    %v1608 = vld [vmem:[#allocation6 + $0x220] sm:$0xff]
    %v1609 = vld [vmem:[#allocation6 + $0x228] sm:$0xff]
    %v1610 = vld [vmem:[#allocation6 + $0x230] sm:$0xff]
    %v1611 = vld [vmem:[#allocation6 + $0x238] sm:$0xff]
    %v1612 = vld [vmem:[#allocation6 + $0x240] sm:$0xff]
    %v1613 = vld [vmem:[#allocation6 + $0x248] sm:$0xff]
    %v1614 = vld [vmem:[#allocation6 + $0x250] sm:$0xff]
    %v1615 = vld [vmem:[#allocation6 + $0x258] sm:$0xff]
    %v1616 = vld [vmem:[#allocation6 + $0x260] sm:$0xff]
    %v1617 = vld [vmem:[#allocation6 + $0x268] sm:$0xff]
    %v1618 = vld [vmem:[#allocation6 + $0x270] sm:$0xff]
    %v1619 = vld [vmem:[#allocation6 + $0x278] sm:$0xff]
    %v1620 = vld [vmem:[#allocation6 + $0x280] sm:$0xff]
    %v1621 = vld [vmem:[#allocation6 + $0x288] sm:$0xff]
    %v1622 = vld [vmem:[#allocation6 + $0x290] sm:$0xff]
    %v1623 = vld [vmem:[#allocation6 + $0x298] sm:$0xff]
    %v1624 = vld [vmem:[#allocation6 + $0x2a0] sm:$0xff]
    %v1625 = vld [vmem:[#allocation6 + $0x2a8] sm:$0xff]
    %v1626 = vld [vmem:[#allocation6 + $0x2b0] sm:$0xff]
    %v1627 = vld [vmem:[#allocation6 + $0x2b8] sm:$0xff]
    %v1628 = vld [vmem:[#allocation6 + $0x2c0] sm:$0xff]
    %v1629 = vld [vmem:[#allocation6 + $0x2c8] sm:$0xff]
    %v1630 = vld [vmem:[#allocation6 + $0x2d0] sm:$0xff]
    %v1631 = vld [vmem:[#allocation6 + $0x2d8] sm:$0xff]
    %v1632 = vld [vmem:[#allocation6 + $0x2e0] sm:$0xff]
    %v1633 = vld [vmem:[#allocation6 + $0x2e8] sm:$0xff]
    %v1634 = vld [vmem:[#allocation6 + $0x2f0] sm:$0xff]
    %v1635 = vld [vmem:[#allocation6 + $0x2f8] sm:$0xff]
    %v1636 = vld [vmem:[#allocation6 + $0x300] sm:$0xff]
    %v1637 = vld [vmem:[#allocation6 + $0x308] sm:$0xff]
    %v1638 = vld [vmem:[#allocation6 + $0x310] sm:$0xff]
    %v1639 = vld [vmem:[#allocation6 + $0x318] sm:$0xff]
    %v1640 = vld [vmem:[#allocation6 + $0x320] sm:$0xff]
    %v1641 = vld [vmem:[#allocation6 + $0x328] sm:$0xff]
    %v1642 = vld [vmem:[#allocation6 + $0x330] sm:$0xff]
    %v1643 = vld [vmem:[#allocation6 + $0x338] sm:$0xff]
    %v1644 = vld [vmem:[#allocation6 + $0x340] sm:$0xff]
    %v1645 = vld [vmem:[#allocation6 + $0x348] sm:$0xff]
    %v1646 = vld [vmem:[#allocation6 + $0x350] sm:$0xff]
    %v1647 = vld [vmem:[#allocation6 + $0x358] sm:$0xff]
    %v1648 = vld [vmem:[#allocation6 + $0x360] sm:$0xff]
    %v1649 = vld [vmem:[#allocation6 + $0x368] sm:$0xff]
    %v1650 = vld [vmem:[#allocation6 + $0x370] sm:$0xff]
    %v1651 = vld [vmem:[#allocation6 + $0x378] sm:$0xff]
    %v1652 = vld [vmem:[#allocation6 + $0x380] sm:$0xff]
    %v1653 = vld [vmem:[#allocation6 + $0x388] sm:$0xff]
    %v1654 = vld [vmem:[#allocation6 + $0x390] sm:$0xff]
    %v1655 = vld [vmem:[#allocation6 + $0x398] sm:$0xff]
    %v1656 = vld [vmem:[#allocation6 + $0x3a0] sm:$0xff]
    %v1657 = vld [vmem:[#allocation6 + $0x3a8] sm:$0xff]
    %v1658 = vld [vmem:[#allocation6 + $0x3b0] sm:$0xff]
    %v1659 = vld [vmem:[#allocation6 + $0x3b8] sm:$0xff]
    %v1660 = vld [vmem:[#allocation6 + $0x3c0] sm:$0xff]
    %v1661 = vld [vmem:[#allocation6 + $0x3c8] sm:$0xff]
    %v1662 = vld [vmem:[#allocation6 + $0x3d0] sm:$0xff]
    %v1663 = vld [vmem:[#allocation6 + $0x3d8] sm:$0xff]
    %v1664 = vld [vmem:[#allocation6 + $0x3e0] sm:$0xff]
    %v1665 = vld [vmem:[#allocation6 + $0x3e8] sm:$0xff]
    %v1666 = vld [vmem:[#allocation6 + $0x3f0] sm:$0xff]
    %v1667 = vld [vmem:[#allocation6 + $0x3f8] sm:$0xff]
    %v1668 = vld [vmem:[#allocation6 + $0x400] sm:$0xff]
    %v1669 = vld [vmem:[#allocation6 + $0x408] sm:$0xff]
    %v1670 = vld [vmem:[#allocation6 + $0x410] sm:$0xff]
    %v1671 = vld [vmem:[#allocation6 + $0x418] sm:$0xff]
    %v1672 = vld [vmem:[#allocation6 + $0x420] sm:$0xff]
    %v1673 = vld [vmem:[#allocation6 + $0x428] sm:$0xff]
    %v1674 = vld [vmem:[#allocation6 + $0x430] sm:$0xff]
    %v1675 = vld [vmem:[#allocation6 + $0x438] sm:$0xff]
    %v1676 = vld [vmem:[#allocation6 + $0x440] sm:$0xff]
    %v1677 = vld [vmem:[#allocation6 + $0x448] sm:$0xff]
    %v1678 = vld [vmem:[#allocation6 + $0x450] sm:$0xff]
    %v1679 = vld [vmem:[#allocation6 + $0x458] sm:$0xff]
    %v1680 = vld [vmem:[#allocation6 + $0x460] sm:$0xff]
    %v1681 = vld [vmem:[#allocation6 + $0x468] sm:$0xff]
    %v1682 = vld [vmem:[#allocation6 + $0x470] sm:$0xff]
    %v1683 = vld [vmem:[#allocation6 + $0x478] sm:$0xff]
    %v1684 = vld [vmem:[#allocation6 + $0x480] sm:$0xff]
    %v1685 = vld [vmem:[#allocation6 + $0x488] sm:$0xff]
    %v1686 = vld [vmem:[#allocation6 + $0x490] sm:$0xff]
    %v1687 = vld [vmem:[#allocation6 + $0x498] sm:$0xff]
    %v1688 = vld [vmem:[#allocation6 + $0x4a0] sm:$0xff]
    %v1689 = vld [vmem:[#allocation6 + $0x4a8] sm:$0xff]
    %v1690 = vld [vmem:[#allocation6 + $0x4b0] sm:$0xff]
    %v1691 = vld [vmem:[#allocation6 + $0x4b8] sm:$0xff]
    %v1692 = vld [vmem:[#allocation6 + $0x4c0] sm:$0xff]
    %v1693 = vld [vmem:[#allocation6 + $0x4c8] sm:$0xff]
    %v1694 = vld [vmem:[#allocation6 + $0x4d0] sm:$0xff]
    %v1695 = vld [vmem:[#allocation6 + $0x4d8] sm:$0xff]
    %v1696 = vld [vmem:[#allocation6 + $0x4e0] sm:$0xff]
    %v1697 = vld [vmem:[#allocation6 + $0x4e8] sm:$0xff]
    %v1698 = vld [vmem:[#allocation6 + $0x4f0] sm:$0xff]
    %v1699 = vld [vmem:[#allocation6 + $0x4f8] sm:$0xff]
    %v1700 = vld [vmem:[#allocation6 + $0x500] sm:$0xff]
    %v1701 = vld [vmem:[#allocation6 + $0x508] sm:$0xff]
    %v1702 = vld [vmem:[#allocation6 + $0x510] sm:$0xff]
    %v1703 = vld [vmem:[#allocation6 + $0x518] sm:$0xff]
    %v1704 = vld [vmem:[#allocation6 + $0x520] sm:$0xff]
    %v1705 = vld [vmem:[#allocation6 + $0x528] sm:$0xff]
    %v1706 = vld [vmem:[#allocation6 + $0x530] sm:$0xff]
    %v1707 = vld [vmem:[#allocation6 + $0x538] sm:$0xff]
    %v1708 = vld [vmem:[#allocation6 + $0x540] sm:$0xff]
    %v1709 = vld [vmem:[#allocation6 + $0x548] sm:$0xff]
    %v1710 = vld [vmem:[#allocation6 + $0x550] sm:$0xff]
    %v1711 = vld [vmem:[#allocation6 + $0x558] sm:$0xff]
    %v1712 = vld [vmem:[#allocation6 + $0x560] sm:$0xff]
    %v1713 = vld [vmem:[#allocation6 + $0x568] sm:$0xff]
    %v1714 = vld [vmem:[#allocation6 + $0x570] sm:$0xff]
    %v1715 = vld [vmem:[#allocation6 + $0x578] sm:$0xff]
    %v1716 = vld [vmem:[#allocation6 + $0x580] sm:$0xff]
    %v1717 = vld [vmem:[#allocation6 + $0x588] sm:$0xff]
    %v1718 = vld [vmem:[#allocation6 + $0x590] sm:$0xff]
    %v1719 = vld [vmem:[#allocation6 + $0x598] sm:$0xff]
    %v1720 = vld [vmem:[#allocation6 + $0x5a0] sm:$0xff]
    %v1721 = vld [vmem:[#allocation6 + $0x5a8] sm:$0xff]
    %v1722 = vld [vmem:[#allocation6 + $0x5b0] sm:$0xff]
    %v1723 = vld [vmem:[#allocation6 + $0x5b8] sm:$0xff]
    %v1724 = vld [vmem:[#allocation6 + $0x5c0] sm:$0xff]
    %v1725 = vld [vmem:[#allocation6 + $0x5c8] sm:$0xff]
    %v1726 = vld [vmem:[#allocation6 + $0x5d0] sm:$0xff]
    %v1727 = vld [vmem:[#allocation6 + $0x5d8] sm:$0xff]
    %v1728 = vld [vmem:[#allocation6 + $0x5e0] sm:$0xff]
    %v1729 = vld [vmem:[#allocation6 + $0x5e8] sm:$0xff]
    %v1730 = vld [vmem:[#allocation6 + $0x5f0] sm:$0xff]
    %v1731 = vld [vmem:[#allocation6 + $0x5f8] sm:$0xff]
    %v1924 = vunpack.c.l.b16 %v1540
    %v1925 = vunpack.c.h.b16 %v1540
    %v1926 = vunpack.c.l.b16 %v1541
    %v1927 = vunpack.c.h.b16 %v1541
    %v1928 = vunpack.c.l.b16 %v1542
    %v1929 = vunpack.c.h.b16 %v1542
    %v1930 = vunpack.c.l.b16 %v1543
    %v1931 = vunpack.c.h.b16 %v1543
    %v1932 = vunpack.c.l.b16 %v1544
    %v1933 = vunpack.c.h.b16 %v1544
    %v1934 = vunpack.c.l.b16 %v1545
    %v1935 = vunpack.c.h.b16 %v1545
    %v1936 = vunpack.c.l.b16 %v1546
    %v1937 = vunpack.c.h.b16 %v1546
    %v1938 = vunpack.c.l.b16 %v1547
    %v1939 = vunpack.c.h.b16 %v1547
    %v1940 = vunpack.c.l.b16 %v1548
    %v1941 = vunpack.c.h.b16 %v1548
    %v1942 = vunpack.c.l.b16 %v1549
    %v1943 = vunpack.c.h.b16 %v1549
    %v1944 = vunpack.c.l.b16 %v1550
    %v1945 = vunpack.c.h.b16 %v1550
    %v1946 = vunpack.c.l.b16 %v1551
    %v1947 = vunpack.c.h.b16 %v1551
    %v1948 = vunpack.c.l.b16 %v1552
    %v1949 = vunpack.c.h.b16 %v1552
    %v1950 = vunpack.c.l.b16 %v1553
    %v1951 = vunpack.c.h.b16 %v1553
    %v1952 = vunpack.c.l.b16 %v1554
    %v1953 = vunpack.c.h.b16 %v1554
    %v1954 = vunpack.c.l.b16 %v1555
    %v1955 = vunpack.c.h.b16 %v1555
    %v1956 = vunpack.c.l.b16 %v1556
    %v1957 = vunpack.c.h.b16 %v1556
    %v1958 = vunpack.c.l.b16 %v1557
    %v1959 = vunpack.c.h.b16 %v1557
    %v1960 = vunpack.c.l.b16 %v1558
    %v1961 = vunpack.c.h.b16 %v1558
    %v1962 = vunpack.c.l.b16 %v1559
    %v1963 = vunpack.c.h.b16 %v1559
    %v1964 = vunpack.c.l.b16 %v1560
    %v1965 = vunpack.c.h.b16 %v1560
    %v1966 = vunpack.c.l.b16 %v1561
    %v1967 = vunpack.c.h.b16 %v1561
    %v1968 = vunpack.c.l.b16 %v1562
    %v1969 = vunpack.c.h.b16 %v1562
    %v1970 = vunpack.c.l.b16 %v1563
    %v1971 = vunpack.c.h.b16 %v1563
    %v1972 = vunpack.c.l.b16 %v1564
    %v1973 = vunpack.c.h.b16 %v1564
    %v1974 = vunpack.c.l.b16 %v1565
    %v1975 = vunpack.c.h.b16 %v1565
    %v1976 = vunpack.c.l.b16 %v1566
    %v1977 = vunpack.c.h.b16 %v1566
    %v1978 = vunpack.c.l.b16 %v1567
    %v1979 = vunpack.c.h.b16 %v1567
    %v1980 = vunpack.c.l.b16 %v1568
    %v1981 = vunpack.c.h.b16 %v1568
    %v1982 = vunpack.c.l.b16 %v1569
    %v1983 = vunpack.c.h.b16 %v1569
    %v1984 = vunpack.c.l.b16 %v1570
    %v1985 = vunpack.c.h.b16 %v1570
    %v1986 = vunpack.c.l.b16 %v1571
    %v1987 = vunpack.c.h.b16 %v1571
    %v1988 = vunpack.c.l.b16 %v1572
    %v1989 = vunpack.c.h.b16 %v1572
    %v1990 = vunpack.c.l.b16 %v1573
    %v1991 = vunpack.c.h.b16 %v1573
    %v1992 = vunpack.c.l.b16 %v1574
    %v1993 = vunpack.c.h.b16 %v1574
    %v1994 = vunpack.c.l.b16 %v1575
    %v1995 = vunpack.c.h.b16 %v1575
    %v1996 = vunpack.c.l.b16 %v1576
    %v1997 = vunpack.c.h.b16 %v1576
    %v1998 = vunpack.c.l.b16 %v1577
    %v1999 = vunpack.c.h.b16 %v1577
    %v2000 = vunpack.c.l.b16 %v1578
    %v2001 = vunpack.c.h.b16 %v1578
    %v2002 = vunpack.c.l.b16 %v1579
    %v2003 = vunpack.c.h.b16 %v1579
    %v2004 = vunpack.c.l.b16 %v1580
    %v2005 = vunpack.c.h.b16 %v1580
    %v2006 = vunpack.c.l.b16 %v1581
    %v2007 = vunpack.c.h.b16 %v1581
    %v2008 = vunpack.c.l.b16 %v1582
    %v2009 = vunpack.c.h.b16 %v1582
    %v2010 = vunpack.c.l.b16 %v1583
    %v2011 = vunpack.c.h.b16 %v1583
    %v2012 = vunpack.c.l.b16 %v1584
    %v2013 = vunpack.c.h.b16 %v1584
    %v2014 = vunpack.c.l.b16 %v1585
    %v2015 = vunpack.c.h.b16 %v1585
    %v2016 = vunpack.c.l.b16 %v1586
    %v2017 = vunpack.c.h.b16 %v1586
    %v2018 = vunpack.c.l.b16 %v1587
    %v2019 = vunpack.c.h.b16 %v1587
    %v2020 = vunpack.c.l.b16 %v1588
    %v2021 = vunpack.c.h.b16 %v1588
    %v2022 = vunpack.c.l.b16 %v1589
    %v2023 = vunpack.c.h.b16 %v1589
    %v2024 = vunpack.c.l.b16 %v1590
    %v2025 = vunpack.c.h.b16 %v1590
    %v2026 = vunpack.c.l.b16 %v1591
    %v2027 = vunpack.c.h.b16 %v1591
    %v2028 = vunpack.c.l.b16 %v1592
    %v2029 = vunpack.c.h.b16 %v1592
    %v2030 = vunpack.c.l.b16 %v1593
    %v2031 = vunpack.c.h.b16 %v1593
    %v2032 = vunpack.c.l.b16 %v1594
    %v2033 = vunpack.c.h.b16 %v1594
    %v2034 = vunpack.c.l.b16 %v1595
    %v2035 = vunpack.c.h.b16 %v1595
    %v2036 = vunpack.c.l.b16 %v1596
    %v2037 = vunpack.c.h.b16 %v1596
    %v2038 = vunpack.c.l.b16 %v1597
    %v2039 = vunpack.c.h.b16 %v1597
    %v2040 = vunpack.c.l.b16 %v1598
    %v2041 = vunpack.c.h.b16 %v1598
    %v2042 = vunpack.c.l.b16 %v1599
    %v2043 = vunpack.c.h.b16 %v1599
    %v2044 = vunpack.c.l.b16 %v1600
    %v2045 = vunpack.c.h.b16 %v1600
    %v2046 = vunpack.c.l.b16 %v1601
    %v2047 = vunpack.c.h.b16 %v1601
    %v2048 = vunpack.c.l.b16 %v1602
    %v2049 = vunpack.c.h.b16 %v1602
    %v2050 = vunpack.c.l.b16 %v1603
    %v2051 = vunpack.c.h.b16 %v1603
    %v2052 = vunpack.c.l.b16 %v1604
    %v2053 = vunpack.c.h.b16 %v1604
    %v2054 = vunpack.c.l.b16 %v1605
    %v2055 = vunpack.c.h.b16 %v1605
    %v2056 = vunpack.c.l.b16 %v1606
    %v2057 = vunpack.c.h.b16 %v1606
    %v2058 = vunpack.c.l.b16 %v1607
    %v2059 = vunpack.c.h.b16 %v1607
    %v2060 = vunpack.c.l.b16 %v1608
    %v2061 = vunpack.c.h.b16 %v1608
    %v2062 = vunpack.c.l.b16 %v1609
    %v2063 = vunpack.c.h.b16 %v1609
    %v2064 = vunpack.c.l.b16 %v1610
    %v2065 = vunpack.c.h.b16 %v1610
    %v2066 = vunpack.c.l.b16 %v1611
    %v2067 = vunpack.c.h.b16 %v1611
    %v2068 = vunpack.c.l.b16 %v1612
    %v2069 = vunpack.c.h.b16 %v1612
    %v2070 = vunpack.c.l.b16 %v1613
    %v2071 = vunpack.c.h.b16 %v1613
    %v2072 = vunpack.c.l.b16 %v1614
    %v2073 = vunpack.c.h.b16 %v1614
    %v2074 = vunpack.c.l.b16 %v1615
    %v2075 = vunpack.c.h.b16 %v1615
    %v2076 = vunpack.c.l.b16 %v1616
    %v2077 = vunpack.c.h.b16 %v1616
    %v2078 = vunpack.c.l.b16 %v1617
    %v2079 = vunpack.c.h.b16 %v1617
    %v2080 = vunpack.c.l.b16 %v1618
    %v2081 = vunpack.c.h.b16 %v1618
    %v2082 = vunpack.c.l.b16 %v1619
    %v2083 = vunpack.c.h.b16 %v1619
    %v2084 = vunpack.c.l.b16 %v1620
    %v2085 = vunpack.c.h.b16 %v1620
    %v2086 = vunpack.c.l.b16 %v1621
    %v2087 = vunpack.c.h.b16 %v1621
    %v2088 = vunpack.c.l.b16 %v1622
    %v2089 = vunpack.c.h.b16 %v1622
    %v2090 = vunpack.c.l.b16 %v1623
    %v2091 = vunpack.c.h.b16 %v1623
    %v2092 = vunpack.c.l.b16 %v1624
    %v2093 = vunpack.c.h.b16 %v1624
    %v2094 = vunpack.c.l.b16 %v1625
    %v2095 = vunpack.c.h.b16 %v1625
    %v2096 = vunpack.c.l.b16 %v1626
    %v2097 = vunpack.c.h.b16 %v1626
    %v2098 = vunpack.c.l.b16 %v1627
    %v2099 = vunpack.c.h.b16 %v1627
    %v2100 = vunpack.c.l.b16 %v1628
    %v2101 = vunpack.c.h.b16 %v1628
    %v2102 = vunpack.c.l.b16 %v1629
    %v2103 = vunpack.c.h.b16 %v1629
    %v2104 = vunpack.c.l.b16 %v1630
    %v2105 = vunpack.c.h.b16 %v1630
    %v2106 = vunpack.c.l.b16 %v1631
    %v2107 = vunpack.c.h.b16 %v1631
    %v2108 = vunpack.c.l.b16 %v1632
    %v2109 = vunpack.c.h.b16 %v1632
    %v2110 = vunpack.c.l.b16 %v1633
    %v2111 = vunpack.c.h.b16 %v1633
    %v2112 = vunpack.c.l.b16 %v1634
    %v2113 = vunpack.c.h.b16 %v1634
    %v2114 = vunpack.c.l.b16 %v1635
    %v2115 = vunpack.c.h.b16 %v1635
    %v2116 = vunpack.c.l.b16 %v1636
    %v2117 = vunpack.c.h.b16 %v1636
    %v2118 = vunpack.c.l.b16 %v1637
    %v2119 = vunpack.c.h.b16 %v1637
    %v2120 = vunpack.c.l.b16 %v1638
    %v2121 = vunpack.c.h.b16 %v1638
    %v2122 = vunpack.c.l.b16 %v1639
    %v2123 = vunpack.c.h.b16 %v1639
    %v2124 = vunpack.c.l.b16 %v1640
    %v2125 = vunpack.c.h.b16 %v1640
    %v2126 = vunpack.c.l.b16 %v1641
    %v2127 = vunpack.c.h.b16 %v1641
    %v2128 = vunpack.c.l.b16 %v1642
    %v2129 = vunpack.c.h.b16 %v1642
    %v2130 = vunpack.c.l.b16 %v1643
    %v2131 = vunpack.c.h.b16 %v1643
    %v2132 = vunpack.c.l.b16 %v1644
    %v2133 = vunpack.c.h.b16 %v1644
    %v2134 = vunpack.c.l.b16 %v1645
    %v2135 = vunpack.c.h.b16 %v1645
    %v2136 = vunpack.c.l.b16 %v1646
    %v2137 = vunpack.c.h.b16 %v1646
    %v2138 = vunpack.c.l.b16 %v1647
    %v2139 = vunpack.c.h.b16 %v1647
    %v2140 = vunpack.c.l.b16 %v1648
    %v2141 = vunpack.c.h.b16 %v1648
    %v2142 = vunpack.c.l.b16 %v1649
    %v2143 = vunpack.c.h.b16 %v1649
    %v2144 = vunpack.c.l.b16 %v1650
    %v2145 = vunpack.c.h.b16 %v1650
    %v2146 = vunpack.c.l.b16 %v1651
    %v2147 = vunpack.c.h.b16 %v1651
    %v2148 = vunpack.c.l.b16 %v1652
    %v2149 = vunpack.c.h.b16 %v1652
    %v2150 = vunpack.c.l.b16 %v1653
    %v2151 = vunpack.c.h.b16 %v1653
    %v2152 = vunpack.c.l.b16 %v1654
    %v2153 = vunpack.c.h.b16 %v1654
    %v2154 = vunpack.c.l.b16 %v1655
    %v2155 = vunpack.c.h.b16 %v1655
    %v2156 = vunpack.c.l.b16 %v1656
    %v2157 = vunpack.c.h.b16 %v1656
    %v2158 = vunpack.c.l.b16 %v1657
    %v2159 = vunpack.c.h.b16 %v1657
    %v2160 = vunpack.c.l.b16 %v1658
    %v2161 = vunpack.c.h.b16 %v1658
    %v2162 = vunpack.c.l.b16 %v1659
    %v2163 = vunpack.c.h.b16 %v1659
    %v2164 = vunpack.c.l.b16 %v1660
    %v2165 = vunpack.c.h.b16 %v1660
    %v2166 = vunpack.c.l.b16 %v1661
    %v2167 = vunpack.c.h.b16 %v1661
    %v2168 = vunpack.c.l.b16 %v1662
    %v2169 = vunpack.c.h.b16 %v1662
    %v2170 = vunpack.c.l.b16 %v1663
    %v2171 = vunpack.c.h.b16 %v1663
    %v2172 = vunpack.c.l.b16 %v1664
    %v2173 = vunpack.c.h.b16 %v1664
    %v2174 = vunpack.c.l.b16 %v1665
    %v2175 = vunpack.c.h.b16 %v1665
    %v2176 = vunpack.c.l.b16 %v1666
    %v2177 = vunpack.c.h.b16 %v1666
    %v2178 = vunpack.c.l.b16 %v1667
    %v2179 = vunpack.c.h.b16 %v1667
    %v2180 = vunpack.c.l.b16 %v1668
    %v2181 = vunpack.c.h.b16 %v1668
    %v2182 = vunpack.c.l.b16 %v1669
    %v2183 = vunpack.c.h.b16 %v1669
    %v2184 = vunpack.c.l.b16 %v1670
    %v2185 = vunpack.c.h.b16 %v1670
    %v2186 = vunpack.c.l.b16 %v1671
    %v2187 = vunpack.c.h.b16 %v1671
    %v2188 = vunpack.c.l.b16 %v1672
    %v2189 = vunpack.c.h.b16 %v1672
    %v2190 = vunpack.c.l.b16 %v1673
    %v2191 = vunpack.c.h.b16 %v1673
    %v2192 = vunpack.c.l.b16 %v1674
    %v2193 = vunpack.c.h.b16 %v1674
    %v2194 = vunpack.c.l.b16 %v1675
    %v2195 = vunpack.c.h.b16 %v1675
    %v2196 = vunpack.c.l.b16 %v1676
    %v2197 = vunpack.c.h.b16 %v1676
    %v2198 = vunpack.c.l.b16 %v1677
    %v2199 = vunpack.c.h.b16 %v1677
    %v2200 = vunpack.c.l.b16 %v1678
    %v2201 = vunpack.c.h.b16 %v1678
    %v2202 = vunpack.c.l.b16 %v1679
    %v2203 = vunpack.c.h.b16 %v1679
    %v2204 = vunpack.c.l.b16 %v1680
    %v2205 = vunpack.c.h.b16 %v1680
    %v2206 = vunpack.c.l.b16 %v1681
    %v2207 = vunpack.c.h.b16 %v1681
    %v2208 = vunpack.c.l.b16 %v1682
    %v2209 = vunpack.c.h.b16 %v1682
    %v2210 = vunpack.c.l.b16 %v1683
    %v2211 = vunpack.c.h.b16 %v1683
    %v2212 = vunpack.c.l.b16 %v1684
    %v2213 = vunpack.c.h.b16 %v1684
    %v2214 = vunpack.c.l.b16 %v1685
    %v2215 = vunpack.c.h.b16 %v1685
    %v2216 = vunpack.c.l.b16 %v1686
    %v2217 = vunpack.c.h.b16 %v1686
    %v2218 = vunpack.c.l.b16 %v1687
    %v2219 = vunpack.c.h.b16 %v1687
    %v2220 = vunpack.c.l.b16 %v1688
    %v2221 = vunpack.c.h.b16 %v1688
    %v2222 = vunpack.c.l.b16 %v1689
    %v2223 = vunpack.c.h.b16 %v1689
    %v2224 = vunpack.c.l.b16 %v1690
    %v2225 = vunpack.c.h.b16 %v1690
    %v2226 = vunpack.c.l.b16 %v1691
    %v2227 = vunpack.c.h.b16 %v1691
    %v2228 = vunpack.c.l.b16 %v1692
    %v2229 = vunpack.c.h.b16 %v1692
    %v2230 = vunpack.c.l.b16 %v1693
    %v2231 = vunpack.c.h.b16 %v1693
    %v2232 = vunpack.c.l.b16 %v1694
    %v2233 = vunpack.c.h.b16 %v1694
    %v2234 = vunpack.c.l.b16 %v1695
    %v2235 = vunpack.c.h.b16 %v1695
    %v2236 = vunpack.c.l.b16 %v1696
    %v2237 = vunpack.c.h.b16 %v1696
    %v2238 = vunpack.c.l.b16 %v1697
    %v2239 = vunpack.c.h.b16 %v1697
    %v2240 = vunpack.c.l.b16 %v1698
    %v2241 = vunpack.c.h.b16 %v1698
    %v2242 = vunpack.c.l.b16 %v1699
    %v2243 = vunpack.c.h.b16 %v1699
    %v2244 = vunpack.c.l.b16 %v1700
    %v2245 = vunpack.c.h.b16 %v1700
    %v2246 = vunpack.c.l.b16 %v1701
    %v2247 = vunpack.c.h.b16 %v1701
    %v2248 = vunpack.c.l.b16 %v1702
    %v2249 = vunpack.c.h.b16 %v1702
    %v2250 = vunpack.c.l.b16 %v1703
    %v2251 = vunpack.c.h.b16 %v1703
    %v2252 = vunpack.c.l.b16 %v1704
    %v2253 = vunpack.c.h.b16 %v1704
    %v2254 = vunpack.c.l.b16 %v1705
    %v2255 = vunpack.c.h.b16 %v1705
    %v2256 = vunpack.c.l.b16 %v1706
    %v2257 = vunpack.c.h.b16 %v1706
    %v2258 = vunpack.c.l.b16 %v1707
    %v2259 = vunpack.c.h.b16 %v1707
    %v2260 = vunpack.c.l.b16 %v1708
    %v2261 = vunpack.c.h.b16 %v1708
    %v2262 = vunpack.c.l.b16 %v1709
    %v2263 = vunpack.c.h.b16 %v1709
    %v2264 = vunpack.c.l.b16 %v1710
    %v2265 = vunpack.c.h.b16 %v1710
    %v2266 = vunpack.c.l.b16 %v1711
    %v2267 = vunpack.c.h.b16 %v1711
    %v2268 = vunpack.c.l.b16 %v1712
    %v2269 = vunpack.c.h.b16 %v1712
    %v2270 = vunpack.c.l.b16 %v1713
    %v2271 = vunpack.c.h.b16 %v1713
    %v2272 = vunpack.c.l.b16 %v1714
    %v2273 = vunpack.c.h.b16 %v1714
    %v2274 = vunpack.c.l.b16 %v1715
    %v2275 = vunpack.c.h.b16 %v1715
    %v2276 = vunpack.c.l.b16 %v1716
    %v2277 = vunpack.c.h.b16 %v1716
    %v2278 = vunpack.c.l.b16 %v1717
    %v2279 = vunpack.c.h.b16 %v1717
    %v2280 = vunpack.c.l.b16 %v1718
    %v2281 = vunpack.c.h.b16 %v1718
    %v2282 = vunpack.c.l.b16 %v1719
    %v2283 = vunpack.c.h.b16 %v1719
    %v2284 = vunpack.c.l.b16 %v1720
    %v2285 = vunpack.c.h.b16 %v1720
    %v2286 = vunpack.c.l.b16 %v1721
    %v2287 = vunpack.c.h.b16 %v1721
    %v2288 = vunpack.c.l.b16 %v1722
    %v2289 = vunpack.c.h.b16 %v1722
    %v2290 = vunpack.c.l.b16 %v1723
    %v2291 = vunpack.c.h.b16 %v1723
    %v2292 = vunpack.c.l.b16 %v1724
    %v2293 = vunpack.c.h.b16 %v1724
    %v2294 = vunpack.c.l.b16 %v1725
    %v2295 = vunpack.c.h.b16 %v1725
    %v2296 = vunpack.c.l.b16 %v1726
    %v2297 = vunpack.c.h.b16 %v1726
    %v2298 = vunpack.c.l.b16 %v1727
    %v2299 = vunpack.c.h.b16 %v1727
    %v2300 = vunpack.c.l.b16 %v1728
    %v2301 = vunpack.c.h.b16 %v1728
    %v2302 = vunpack.c.l.b16 %v1729
    %v2303 = vunpack.c.h.b16 %v1729
    %v2304 = vunpack.c.l.b16 %v1730
    %v2305 = vunpack.c.h.b16 %v1730
    %v2306 = vunpack.c.l.b16 %v1731
    %v2307 = vunpack.c.h.b16 %v1731
    %v2308 = vpack.c.b16 %v1930, %v1924
    %v2309 = vpack.c.b16 %v1931, %v1925
    %v2310 = vpack.c.b16 %v1932, %v1926
    %v2311 = vpack.c.b16 %v1933, %v1927
    %v2312 = vpack.c.b16 %v1934, %v1928
    %v2313 = vpack.c.b16 %v1935, %v1929
    %v2314 = vpack.c.b16 %v1942, %v1936
    %v2315 = vpack.c.b16 %v1943, %v1937
    %v2316 = vpack.c.b16 %v1944, %v1938
    %v2317 = vpack.c.b16 %v1945, %v1939
    %v2318 = vpack.c.b16 %v1946, %v1940
    %v2319 = vpack.c.b16 %v1947, %v1941
    %v2320 = vpack.c.b16 %v1954, %v1948
    %v2321 = vpack.c.b16 %v1955, %v1949
    %v2322 = vpack.c.b16 %v1956, %v1950
    %v2323 = vpack.c.b16 %v1957, %v1951
    %v2324 = vpack.c.b16 %v1958, %v1952
    %v2325 = vpack.c.b16 %v1959, %v1953
    %v2326 = vpack.c.b16 %v1966, %v1960
    %v2327 = vpack.c.b16 %v1967, %v1961
    %v2328 = vpack.c.b16 %v1968, %v1962
    %v2329 = vpack.c.b16 %v1969, %v1963
    %v2330 = vpack.c.b16 %v1970, %v1964
    %v2331 = vpack.c.b16 %v1971, %v1965
    %v2332 = vpack.c.b16 %v1978, %v1972
    %v2333 = vpack.c.b16 %v1979, %v1973
    %v2334 = vpack.c.b16 %v1980, %v1974
    %v2335 = vpack.c.b16 %v1981, %v1975
    %v2336 = vpack.c.b16 %v1982, %v1976
    %v2337 = vpack.c.b16 %v1983, %v1977
    %v2338 = vpack.c.b16 %v1990, %v1984
    %v2339 = vpack.c.b16 %v1991, %v1985
    %v2340 = vpack.c.b16 %v1992, %v1986
    %v2341 = vpack.c.b16 %v1993, %v1987
    %v2342 = vpack.c.b16 %v1994, %v1988
    %v2343 = vpack.c.b16 %v1995, %v1989
    %v2344 = vpack.c.b16 %v2002, %v1996
    %v2345 = vpack.c.b16 %v2003, %v1997
    %v2346 = vpack.c.b16 %v2004, %v1998
    %v2347 = vpack.c.b16 %v2005, %v1999
    %v2348 = vpack.c.b16 %v2006, %v2000
    %v2349 = vpack.c.b16 %v2007, %v2001
    %v2350 = vpack.c.b16 %v2014, %v2008
    %v2351 = vpack.c.b16 %v2015, %v2009
    %v2352 = vpack.c.b16 %v2016, %v2010
    %v2353 = vpack.c.b16 %v2017, %v2011
    %v2354 = vpack.c.b16 %v2018, %v2012
    %v2355 = vpack.c.b16 %v2019, %v2013
    %v2356 = vpack.c.b16 %v2026, %v2020
    %v2357 = vpack.c.b16 %v2027, %v2021
    %v2358 = vpack.c.b16 %v2028, %v2022
    %v2359 = vpack.c.b16 %v2029, %v2023
    %v2360 = vpack.c.b16 %v2030, %v2024
    %v2361 = vpack.c.b16 %v2031, %v2025
    %v2362 = vpack.c.b16 %v2038, %v2032
    %v2363 = vpack.c.b16 %v2039, %v2033
    %v2364 = vpack.c.b16 %v2040, %v2034
    %v2365 = vpack.c.b16 %v2041, %v2035
    %v2366 = vpack.c.b16 %v2042, %v2036
    %v2367 = vpack.c.b16 %v2043, %v2037
    %v2368 = vpack.c.b16 %v2050, %v2044
    %v2369 = vpack.c.b16 %v2051, %v2045
    %v2370 = vpack.c.b16 %v2052, %v2046
    %v2371 = vpack.c.b16 %v2053, %v2047
    %v2372 = vpack.c.b16 %v2054, %v2048
    %v2373 = vpack.c.b16 %v2055, %v2049
    %v2374 = vpack.c.b16 %v2062, %v2056
    %v2375 = vpack.c.b16 %v2063, %v2057
    %v2376 = vpack.c.b16 %v2064, %v2058
    %v2377 = vpack.c.b16 %v2065, %v2059
    %v2378 = vpack.c.b16 %v2066, %v2060
    %v2379 = vpack.c.b16 %v2067, %v2061
    %v2380 = vpack.c.b16 %v2074, %v2068
    %v2381 = vpack.c.b16 %v2075, %v2069
    %v2382 = vpack.c.b16 %v2076, %v2070
    %v2383 = vpack.c.b16 %v2077, %v2071
    %v2384 = vpack.c.b16 %v2078, %v2072
    %v2385 = vpack.c.b16 %v2079, %v2073
    %v2386 = vpack.c.b16 %v2086, %v2080
    %v2387 = vpack.c.b16 %v2087, %v2081
    %v2388 = vpack.c.b16 %v2088, %v2082
    %v2389 = vpack.c.b16 %v2089, %v2083
    %v2390 = vpack.c.b16 %v2090, %v2084
    %v2391 = vpack.c.b16 %v2091, %v2085
    %v2392 = vpack.c.b16 %v2098, %v2092
    %v2393 = vpack.c.b16 %v2099, %v2093
    %v2394 = vpack.c.b16 %v2100, %v2094
    %v2395 = vpack.c.b16 %v2101, %v2095
    %v2396 = vpack.c.b16 %v2102, %v2096
    %v2397 = vpack.c.b16 %v2103, %v2097
    %v2398 = vpack.c.b16 %v2110, %v2104
    %v2399 = vpack.c.b16 %v2111, %v2105
    %v2400 = vpack.c.b16 %v2112, %v2106
    %v2401 = vpack.c.b16 %v2113, %v2107
    %v2402 = vpack.c.b16 %v2114, %v2108
    %v2403 = vpack.c.b16 %v2115, %v2109
    %v2404 = vpack.c.b16 %v2122, %v2116
    %v2405 = vpack.c.b16 %v2123, %v2117
    %v2406 = vpack.c.b16 %v2124, %v2118
    %v2407 = vpack.c.b16 %v2125, %v2119
    %v2408 = vpack.c.b16 %v2126, %v2120
    %v2409 = vpack.c.b16 %v2127, %v2121
    %v2410 = vpack.c.b16 %v2134, %v2128
    %v2411 = vpack.c.b16 %v2135, %v2129
    %v2412 = vpack.c.b16 %v2136, %v2130
    %v2413 = vpack.c.b16 %v2137, %v2131
    %v2414 = vpack.c.b16 %v2138, %v2132
    %v2415 = vpack.c.b16 %v2139, %v2133
    %v2416 = vpack.c.b16 %v2146, %v2140
    %v2417 = vpack.c.b16 %v2147, %v2141
    %v2418 = vpack.c.b16 %v2148, %v2142
    %v2419 = vpack.c.b16 %v2149, %v2143
    %v2420 = vpack.c.b16 %v2150, %v2144
    %v2421 = vpack.c.b16 %v2151, %v2145
    %v2422 = vpack.c.b16 %v2158, %v2152
    %v2423 = vpack.c.b16 %v2159, %v2153
    %v2424 = vpack.c.b16 %v2160, %v2154
    %v2425 = vpack.c.b16 %v2161, %v2155
    %v2426 = vpack.c.b16 %v2162, %v2156
    %v2427 = vpack.c.b16 %v2163, %v2157
    %v2428 = vpack.c.b16 %v2170, %v2164
    %v2429 = vpack.c.b16 %v2171, %v2165
    %v2430 = vpack.c.b16 %v2172, %v2166
    %v2431 = vpack.c.b16 %v2173, %v2167
    %v2432 = vpack.c.b16 %v2174, %v2168
    %v2433 = vpack.c.b16 %v2175, %v2169
    %v2434 = vpack.c.b16 %v2182, %v2176
    %v2435 = vpack.c.b16 %v2183, %v2177
    %v2436 = vpack.c.b16 %v2184, %v2178
    %v2437 = vpack.c.b16 %v2185, %v2179
    %v2438 = vpack.c.b16 %v2186, %v2180
    %v2439 = vpack.c.b16 %v2187, %v2181
    %v2440 = vpack.c.b16 %v2194, %v2188
    %v2441 = vpack.c.b16 %v2195, %v2189
    %v2442 = vpack.c.b16 %v2196, %v2190
    %v2443 = vpack.c.b16 %v2197, %v2191
    %v2444 = vpack.c.b16 %v2198, %v2192
    %v2445 = vpack.c.b16 %v2199, %v2193
    %v2446 = vpack.c.b16 %v2206, %v2200
    %v2447 = vpack.c.b16 %v2207, %v2201
    %v2448 = vpack.c.b16 %v2208, %v2202
    %v2449 = vpack.c.b16 %v2209, %v2203
    %v2450 = vpack.c.b16 %v2210, %v2204
    %v2451 = vpack.c.b16 %v2211, %v2205
    %v2452 = vpack.c.b16 %v2218, %v2212
    %v2453 = vpack.c.b16 %v2219, %v2213
    %v2454 = vpack.c.b16 %v2220, %v2214
    %v2455 = vpack.c.b16 %v2221, %v2215
    %v2456 = vpack.c.b16 %v2222, %v2216
    %v2457 = vpack.c.b16 %v2223, %v2217
    %v2458 = vpack.c.b16 %v2230, %v2224
    %v2459 = vpack.c.b16 %v2231, %v2225
    %v2460 = vpack.c.b16 %v2232, %v2226
    %v2461 = vpack.c.b16 %v2233, %v2227
    %v2462 = vpack.c.b16 %v2234, %v2228
    %v2463 = vpack.c.b16 %v2235, %v2229
    %v2464 = vpack.c.b16 %v2242, %v2236
    %v2465 = vpack.c.b16 %v2243, %v2237
    %v2466 = vpack.c.b16 %v2244, %v2238
    %v2467 = vpack.c.b16 %v2245, %v2239
    %v2468 = vpack.c.b16 %v2246, %v2240
    %v2469 = vpack.c.b16 %v2247, %v2241
    %v2470 = vpack.c.b16 %v2254, %v2248
    %v2471 = vpack.c.b16 %v2255, %v2249
    %v2472 = vpack.c.b16 %v2256, %v2250
    %v2473 = vpack.c.b16 %v2257, %v2251
    %v2474 = vpack.c.b16 %v2258, %v2252
    %v2475 = vpack.c.b16 %v2259, %v2253
    %v2476 = vpack.c.b16 %v2266, %v2260
    %v2477 = vpack.c.b16 %v2267, %v2261
    %v2478 = vpack.c.b16 %v2268, %v2262
    %v2479 = vpack.c.b16 %v2269, %v2263
    %v2480 = vpack.c.b16 %v2270, %v2264
    %v2481 = vpack.c.b16 %v2271, %v2265
    %v2482 = vpack.c.b16 %v2278, %v2272
    %v2483 = vpack.c.b16 %v2279, %v2273
    %v2484 = vpack.c.b16 %v2280, %v2274
    %v2485 = vpack.c.b16 %v2281, %v2275
    %v2486 = vpack.c.b16 %v2282, %v2276
    %v2487 = vpack.c.b16 %v2283, %v2277
    %v2488 = vpack.c.b16 %v2290, %v2284
    %v2489 = vpack.c.b16 %v2291, %v2285
    %v2490 = vpack.c.b16 %v2292, %v2286
    %v2491 = vpack.c.b16 %v2293, %v2287
    %v2492 = vpack.c.b16 %v2294, %v2288
    %v2493 = vpack.c.b16 %v2295, %v2289
    %v2494 = vpack.c.b16 %v2302, %v2296
    %v2495 = vpack.c.b16 %v2303, %v2297
    %v2496 = vpack.c.b16 %v2304, %v2298
    %v2497 = vpack.c.b16 %v2305, %v2299
    %v2498 = vpack.c.b16 %v2306, %v2300
    %v2499 = vpack.c.b16 %v2307, %v2301
    %2692 = vmatprep.subr.bf16.mxu0 %v2309
    %2693 = vmatpush1.bf16.msra.mxu0 %v2308
    %2694 = vmatprep.subr.bf16.mxu0 %v2315
    %2695 = vmatpush1.bf16.msra.mxu0 %v2314
    %2696 = vmatprep.subr.bf16.mxu0 %v2321
    %2697 = vmatpush1.bf16.msra.mxu0 %v2320
    %2698 = vmatprep.subr.bf16.mxu0 %v2327
    %2699 = vmatpush1.bf16.msra.mxu0 %v2326
    %2700 = vmatprep.subr.bf16.mxu0 %v2333
    %2701 = vmatpush1.bf16.msra.mxu0 %v2332
    %2702 = vmatprep.subr.bf16.mxu0 %v2339
    %2703 = vmatpush1.bf16.msra.mxu0 %v2338
    %2704 = vmatprep.subr.bf16.mxu0 %v2345
    %2705 = vmatpush1.bf16.msra.mxu0 %v2344
    %2706 = vmatprep.subr.bf16.mxu0 %v2351
    %2707 = vmatpush1.bf16.msra.mxu0 %v2350
    %2708 = vmatprep.subr.bf16.mxu0 %v2357
    %2709 = vmatpush1.bf16.msra.mxu0 %v2356
    %2710 = vmatprep.subr.bf16.mxu0 %v2363
    %2711 = vmatpush1.bf16.msra.mxu0 %v2362
    %2712 = vmatprep.subr.bf16.mxu0 %v2369
    %2713 = vmatpush1.bf16.msra.mxu0 %v2368
    %2714 = vmatprep.subr.bf16.mxu0 %v2375
    %2715 = vmatpush1.bf16.msra.mxu0 %v2374
    %2716 = vmatprep.subr.bf16.mxu0 %v2381
    %2717 = vmatpush1.bf16.msra.mxu0 %v2380
    %2718 = vmatprep.subr.bf16.mxu0 %v2387
    %2719 = vmatpush1.bf16.msra.mxu0 %v2386
    %2720 = vmatprep.subr.bf16.mxu0 %v2393
    %2721 = vmatpush1.bf16.msra.mxu0 %v2392
    %2722 = vmatprep.subr.bf16.mxu0 %v2399
    %2723 = vmatpush1.bf16.msra.mxu0 %v2398
    %2724 = vmatprep.mubr.bf16.mxu0 %v1537
    %2725 = vmatmul.mubr.bf16.gmra.mrb[0].mxu0 %v1536
    %v2726 = vpop.f32.mrb[0].mxu0
    %v2727 = vadd.f32 0.0, %v2726
    %v2728 = vpop.f32.mrb[0].mxu0
    %v2729 = vadd.f32 0.0, %v2728
    %v2730 = vpop.f32.mrb[0].mxu0
    %v2731 = vpop.f32.mrb[0].mxu0
    %2732 = vdwg.mxu0
    %2733 = vmatprep.subr.bf16.mxu0 %v2405
    %2734 = vmatpush1.bf16.msra.mxu0 %v2404
    %2735 = vmatprep.subr.bf16.mxu0 %v2411
    %2736 = vmatpush1.bf16.msra.mxu0 %v2410
    %2737 = vmatprep.subr.bf16.mxu0 %v2417
    %2738 = vmatpush1.bf16.msra.mxu0 %v2416
    %2739 = vmatprep.subr.bf16.mxu0 %v2423
    %2740 = vmatpush1.bf16.msra.mxu0 %v2422
    %2741 = vmatprep.subr.bf16.mxu0 %v2429
    %2742 = vmatpush1.bf16.msra.mxu0 %v2428
    %2743 = vmatprep.subr.bf16.mxu0 %v2435
    %2744 = vmatpush1.bf16.msra.mxu0 %v2434
    %2745 = vmatprep.subr.bf16.mxu0 %v2441
    %2746 = vmatpush1.bf16.msra.mxu0 %v2440
    %2747 = vmatprep.subr.bf16.mxu0 %v2447
    %2748 = vmatpush1.bf16.msra.mxu0 %v2446
    %2749 = vmatprep.subr.bf16.mxu0 %v2453
    %2750 = vmatpush1.bf16.msra.mxu0 %v2452
    %2751 = vmatprep.subr.bf16.mxu0 %v2459
    %2752 = vmatpush1.bf16.msra.mxu0 %v2458
    %2753 = vmatprep.subr.bf16.mxu0 %v2465
    %2754 = vmatpush1.bf16.msra.mxu0 %v2464
    %2755 = vmatprep.subr.bf16.mxu0 %v2471
    %2756 = vmatpush1.bf16.msra.mxu0 %v2470
    %2757 = vmatprep.subr.bf16.mxu0 %v2477
    %2758 = vmatpush1.bf16.msra.mxu0 %v2476
    %2759 = vmatprep.subr.bf16.mxu0 %v2483
    %2760 = vmatpush1.bf16.msra.mxu0 %v2482
    %2761 = vmatprep.subr.bf16.mxu0 %v2489
    %2762 = vmatpush1.bf16.msra.mxu0 %v2488
    %2763 = vmatprep.subr.bf16.mxu0 %v2495
    %2764 = vmatpush1.bf16.msra.mxu0 %v2494
    %2765 = vmatprep.mubr.bf16.mxu0 %v1539
    %2766 = vmatmul.mubr.bf16.gmra.mrb[0].mxu0 %v1538
    %v2767 = vpop.f32.mrb[0].mxu0
    %v2768 = vadd.f32 %v2727, %v2767
    %v2769 = vpop.f32.mrb[0].mxu0
    %v2770 = vadd.f32 %v2729, %v2769
    %v2771 = vpop.f32.mrb[0].mxu0
    %v2772 = vpop.f32.mrb[0].mxu0
    %2773 = vdwg.mxu0
    %2774 = vmatprep.subr.bf16.mxu0 %v2311
    %2775 = vmatpush1.bf16.msra.mxu0 %v2310
    %2776 = vmatprep.subr.bf16.mxu0 %v2317
    %2777 = vmatpush1.bf16.msra.mxu0 %v2316
    %2778 = vmatprep.subr.bf16.mxu0 %v2323
    %2779 = vmatpush1.bf16.msra.mxu0 %v2322
    %2780 = vmatprep.subr.bf16.mxu0 %v2329
    %2781 = vmatpush1.bf16.msra.mxu0 %v2328
    %2782 = vmatprep.subr.bf16.mxu0 %v2335
    %2783 = vmatpush1.bf16.msra.mxu0 %v2334
    %2784 = vmatprep.subr.bf16.mxu0 %v2341
    %2785 = vmatpush1.bf16.msra.mxu0 %v2340
    %2786 = vmatprep.subr.bf16.mxu0 %v2347
    %2787 = vmatpush1.bf16.msra.mxu0 %v2346
    %2788 = vmatprep.subr.bf16.mxu0 %v2353
    %2789 = vmatpush1.bf16.msra.mxu0 %v2352
    %2790 = vmatprep.subr.bf16.mxu0 %v2359
    %2791 = vmatpush1.bf16.msra.mxu0 %v2358
    %2792 = vmatprep.subr.bf16.mxu0 %v2365
    %2793 = vmatpush1.bf16.msra.mxu0 %v2364
    %2794 = vmatprep.subr.bf16.mxu0 %v2371
    %2795 = vmatpush1.bf16.msra.mxu0 %v2370
    %2796 = vmatprep.subr.bf16.mxu0 %v2377
    %2797 = vmatpush1.bf16.msra.mxu0 %v2376
    %2798 = vmatprep.subr.bf16.mxu0 %v2383
    %2799 = vmatpush1.bf16.msra.mxu0 %v2382
    %2800 = vmatprep.subr.bf16.mxu0 %v2389
    %2801 = vmatpush1.bf16.msra.mxu0 %v2388
    %2802 = vmatprep.subr.bf16.mxu0 %v2395
    %2803 = vmatpush1.bf16.msra.mxu0 %v2394
    %2804 = vmatprep.subr.bf16.mxu0 %v2401
    %2805 = vmatpush1.bf16.msra.mxu0 %v2400
    %2806 = vmatprep.mubr.bf16.mxu0 %v1537
    %2807 = vmatmul.mubr.bf16.gmra.mrb[0].mxu0 %v1536
    %v2808 = vpop.f32.mrb[0].mxu0
    %v2809 = vadd.f32 0.0, %v2808
    %v2810 = vpop.f32.mrb[0].mxu0
    %v2811 = vadd.f32 0.0, %v2810
    %v2812 = vpop.f32.mrb[0].mxu0
    %v2813 = vpop.f32.mrb[0].mxu0
    %2814 = vdwg.mxu0
    %2815 = vmatprep.subr.bf16.mxu0 %v2407
    %2816 = vmatpush1.bf16.msra.mxu0 %v2406
    %2817 = vmatprep.subr.bf16.mxu0 %v2413
    %2818 = vmatpush1.bf16.msra.mxu0 %v2412
    %2819 = vmatprep.subr.bf16.mxu0 %v2419
    %2820 = vmatpush1.bf16.msra.mxu0 %v2418
    %2821 = vmatprep.subr.bf16.mxu0 %v2425
    %2822 = vmatpush1.bf16.msra.mxu0 %v2424
    %2823 = vmatprep.subr.bf16.mxu0 %v2431
    %2824 = vmatpush1.bf16.msra.mxu0 %v2430
    %2825 = vmatprep.subr.bf16.mxu0 %v2437
    %2826 = vmatpush1.bf16.msra.mxu0 %v2436
    %2827 = vmatprep.subr.bf16.mxu0 %v2443
    %2828 = vmatpush1.bf16.msra.mxu0 %v2442
    %2829 = vmatprep.subr.bf16.mxu0 %v2449
    %2830 = vmatpush1.bf16.msra.mxu0 %v2448
    %2831 = vmatprep.subr.bf16.mxu0 %v2455
    %2832 = vmatpush1.bf16.msra.mxu0 %v2454
    %2833 = vmatprep.subr.bf16.mxu0 %v2461
    %2834 = vmatpush1.bf16.msra.mxu0 %v2460
    %2835 = vmatprep.subr.bf16.mxu0 %v2467
    %2836 = vmatpush1.bf16.msra.mxu0 %v2466
    %2837 = vmatprep.subr.bf16.mxu0 %v2473
    %2838 = vmatpush1.bf16.msra.mxu0 %v2472
    %2839 = vmatprep.subr.bf16.mxu0 %v2479
    %2840 = vmatpush1.bf16.msra.mxu0 %v2478
    %2841 = vmatprep.subr.bf16.mxu0 %v2485
    %2842 = vmatpush1.bf16.msra.mxu0 %v2484
    %2843 = vmatprep.subr.bf16.mxu0 %v2491
    %2844 = vmatpush1.bf16.msra.mxu0 %v2490
    %2845 = vmatprep.subr.bf16.mxu0 %v2497
    %2846 = vmatpush1.bf16.msra.mxu0 %v2496
    %2847 = vmatprep.mubr.bf16.mxu0 %v1539
    %2848 = vmatmul.mubr.bf16.gmra.mrb[0].mxu0 %v1538
    %v2849 = vpop.f32.mrb[0].mxu0
    %v2850 = vadd.f32 %v2809, %v2849
    %v2851 = vpop.f32.mrb[0].mxu0
    %v2852 = vadd.f32 %v2811, %v2851
    %v2853 = vpop.f32.mrb[0].mxu0
    %v2854 = vpop.f32.mrb[0].mxu0
    %2855 = vdwg.mxu0
    %2856 = vmatprep.subr.bf16.mxu0 %v2313
    %2857 = vmatpush1.bf16.msra.mxu0 %v2312
    %2858 = vmatprep.subr.bf16.mxu0 %v2319
    %2859 = vmatpush1.bf16.msra.mxu0 %v2318
    %2860 = vmatprep.subr.bf16.mxu0 %v2325
    %2861 = vmatpush1.bf16.msra.mxu0 %v2324
    %2862 = vmatprep.subr.bf16.mxu0 %v2331
    %2863 = vmatpush1.bf16.msra.mxu0 %v2330
    %2864 = vmatprep.subr.bf16.mxu0 %v2337
    %2865 = vmatpush1.bf16.msra.mxu0 %v2336
    %2866 = vmatprep.subr.bf16.mxu0 %v2343
    %2867 = vmatpush1.bf16.msra.mxu0 %v2342
    %2868 = vmatprep.subr.bf16.mxu0 %v2349
    %2869 = vmatpush1.bf16.msra.mxu0 %v2348
    %2870 = vmatprep.subr.bf16.mxu0 %v2355
    %2871 = vmatpush1.bf16.msra.mxu0 %v2354
    %2872 = vmatprep.subr.bf16.mxu0 %v2361
    %2873 = vmatpush1.bf16.msra.mxu0 %v2360
    %2874 = vmatprep.subr.bf16.mxu0 %v2367
    %2875 = vmatpush1.bf16.msra.mxu0 %v2366
    %2876 = vmatprep.subr.bf16.mxu0 %v2373
    %2877 = vmatpush1.bf16.msra.mxu0 %v2372
    %2878 = vmatprep.subr.bf16.mxu0 %v2379
    %2879 = vmatpush1.bf16.msra.mxu0 %v2378
    %2880 = vmatprep.subr.bf16.mxu0 %v2385
    %2881 = vmatpush1.bf16.msra.mxu0 %v2384
    %2882 = vmatprep.subr.bf16.mxu0 %v2391
    %2883 = vmatpush1.bf16.msra.mxu0 %v2390
    %2884 = vmatprep.subr.bf16.mxu0 %v2397
    %2885 = vmatpush1.bf16.msra.mxu0 %v2396
    %2886 = vmatprep.subr.bf16.mxu0 %v2403
    %2887 = vmatpush1.bf16.msra.mxu0 %v2402
    %2888 = vmatprep.mubr.bf16.mxu0 %v1537
    %2889 = vmatmul.mubr.bf16.gmra.mrb[0].mxu0 %v1536
    %v2890 = vpop.f32.mrb[0].mxu0
    %v2891 = vadd.f32 0.0, %v2890
    %v2892 = vpop.f32.mrb[0].mxu0
    %v2893 = vadd.f32 0.0, %v2892
    %v2894 = vpop.f32.mrb[0].mxu0
    %v2895 = vpop.f32.mrb[0].mxu0
    %2896 = vdwg.mxu0
    %2897 = vmatprep.subr.bf16.mxu0 %v2409
    %2898 = vmatpush1.bf16.msra.mxu0 %v2408
    %2899 = vmatprep.subr.bf16.mxu0 %v2415
    %2900 = vmatpush1.bf16.msra.mxu0 %v2414
    %2901 = vmatprep.subr.bf16.mxu0 %v2421
    %2902 = vmatpush1.bf16.msra.mxu0 %v2420
    %2903 = vmatprep.subr.bf16.mxu0 %v2427
    %2904 = vmatpush1.bf16.msra.mxu0 %v2426
    %2905 = vmatprep.subr.bf16.mxu0 %v2433
    %2906 = vmatpush1.bf16.msra.mxu0 %v2432
    %2907 = vmatprep.subr.bf16.mxu0 %v2439
    %2908 = vmatpush1.bf16.msra.mxu0 %v2438
    %2909 = vmatprep.subr.bf16.mxu0 %v2445
    %2910 = vmatpush1.bf16.msra.mxu0 %v2444
    %2911 = vmatprep.subr.bf16.mxu0 %v2451
    %2912 = vmatpush1.bf16.msra.mxu0 %v2450
    %2913 = vmatprep.subr.bf16.mxu0 %v2457
    %2914 = vmatpush1.bf16.msra.mxu0 %v2456
    %2915 = vmatprep.subr.bf16.mxu0 %v2463
    %2916 = vmatpush1.bf16.msra.mxu0 %v2462
    %2917 = vmatprep.subr.bf16.mxu0 %v2469
    %2918 = vmatpush1.bf16.msra.mxu0 %v2468
    %2919 = vmatprep.subr.bf16.mxu0 %v2475
    %2920 = vmatpush1.bf16.msra.mxu0 %v2474
    %2921 = vmatprep.subr.bf16.mxu0 %v2481
    %2922 = vmatpush1.bf16.msra.mxu0 %v2480
    %2923 = vmatprep.subr.bf16.mxu0 %v2487
    %2924 = vmatpush1.bf16.msra.mxu0 %v2486
    %2925 = vmatprep.subr.bf16.mxu0 %v2493
    %2926 = vmatpush1.bf16.msra.mxu0 %v2492
    %2927 = vmatprep.subr.bf16.mxu0 %v2499
    %2928 = vmatpush1.bf16.msra.mxu0 %v2498
    %2929 = vmatprep.mubr.bf16.mxu0 %v1539
    %2930 = vmatmul.mubr.bf16.gmra.mrb[0].mxu0 %v1538
    %v2931 = vpop.f32.mrb[0].mxu0
    %v2932 = vadd.f32 %v2891, %v2931
    %v2933 = vpop.f32.mrb[0].mxu0
    %v2934 = vadd.f32 %v2893, %v2933
    %v2935 = vpop.f32.mrb[0].mxu0
    %v2936 = vpop.f32.mrb[0].mxu0
    %2937 = vdwg.mxu0
    %v2938 = vtanh.pop %v2768
    %v2939 = vtanh.pop %v2770
    %v2940 = vtanh.pop %v2850
    %v2941 = vtanh.pop %v2852
    %v2942 = vtanh.pop %v2932
    %v2943 = vtanh.pop %v2934
    %2944 = vst [vmem:[%s5] sm:$0xff] %v2938
    %2945 = vst [vmem:[%s5 + $0x8] sm:$0xff] %v2939
    %2946 = vst [vmem:[%s5 + $0x10] sm:$0xff] %v2940
    %2947 = vst [vmem:[%s5 + $0x18] sm:$0xff] %v2941
    %2948 = vst [vmem:[%s5 + $0x20] sm:$0xff] %v2942
    %2949 = vst [vmem:[%s5 + $0x28] sm:$0xff] %v2943
    // Predicated region
    $region34: #{_generator_forward_jit.1} parent=1 // pred_check
      _
    $region35: #{_generator_forward_jit.1} parent=1 // pred_check_branch
      %2951 = sbr.rel (0) target = $region37
    $region36: #{_generator_forward_jit.1} parent=1 // pred_region
      _
    $region37: #{_generator_forward_jit.1} parent=1 // pred_fallthru
      _
    // Predicated region
    $region38: #{_generator_forward_jit.1} parent=1 // pred_check
      _
    $region39: #{_generator_forward_jit.1} parent=1 // pred_check_branch
      %2953 = sbr.rel (0) target = $region41
    $region40: #{_generator_forward_jit.1} parent=1 // pred_region
      _
    $region41: #{_generator_forward_jit.1} parent=1 // pred_fallthru
      _
    %2954 = vsyncpa [#allocation3], 1
    %2955 = vsyncpa [#allocation5], 1

</llo_original>
